<compile_context>
chip_gen: v7x
topology: tpu7x:2x2x1
jax: 0.10.0
libtpu: 0.0.40
codegen_flags: <defaults>
</compile_context>

<pallas_src>
import functools

import jax
import jax.numpy as jnp
from jax.experimental import pallas as pl
from jax.experimental.pallas import tpu as pltpu


def _round_up(x, m):
    return ((x + m - 1) // m) * m


def _gelu(x):
    c = jnp.asarray(0.7978845608028654, x.dtype)  # sqrt(2/pi)
    half = jnp.asarray(0.5, x.dtype)
    one = jnp.asarray(1.0, x.dtype)
    k = jnp.asarray(0.044715, x.dtype)
    return half * x * (one + jnp.tanh(c * (x + k * x * x * x)))


def _default_compute_dtype():
    # bf16 VALU/EUP exist on v6e/v7x; v5e (and older) lack them -> keep f32.
    try:
        kind = jax.devices()[0].device_kind.lower()
    except Exception:
        return jnp.float32
    if "v6" in kind or "v7" in kind or "7x" in kind:
        return jnp.bfloat16
    return jnp.float32


def head_kernel(cls1_ref, cls2_ref, labels_ref,
                w_pre1_ref, b_pre1_ref,
                w_pre2_ref, b_pre2_ref,
                w_c1a_ref, w_c1b_ref, b_c1_ref,
                w_c2_ref, b_c2_ref,
                out_ref,
                *, num_labels, compute_dtype):
    cdt = compute_dtype

    # ---- per-branch head: gelu -> (dropout=id) -> Linear -> gelu -> (dropout=id)
    h1 = _gelu(cls1_ref[...].astype(cdt))                       # dropout_1 (id)
    h2 = _gelu(cls2_ref[...].astype(cdt))                       # dropout_2 (id)
    h1 = jnp.dot(h1.astype(jnp.bfloat16), w_pre1_ref[...],
                 preferred_element_type=jnp.float32) + b_pre1_ref[...]
    h1 = _gelu(h1.astype(cdt))                                  # dropout_1_2 (id)
    h2 = jnp.dot(h2.astype(jnp.bfloat16), w_pre2_ref[...],
                 preferred_element_type=jnp.float32) + b_pre2_ref[...]
    h2 = _gelu(h2.astype(cdt))                                  # dropout_2_2 (id)

    # ---- classifier_1 on the "concatenated" features, without materializing
    #      the concat: split-weight matmuls accumulated in registers.
    o = (jnp.dot(h1.astype(jnp.bfloat16), w_c1a_ref[...],
                 preferred_element_type=jnp.float32)
         + jnp.dot(h2.astype(jnp.bfloat16), w_c1b_ref[...],
                   preferred_element_type=jnp.float32)
         + b_c1_ref[...])
    o = _gelu(o.astype(cdt))                                    # dropout_3 (id)

    # ---- classifier_2, lane-dense padded output. Padded columns carry a huge
    #      negative f32 bias so they contribute nothing to the LSE.
    logits = jnp.dot(o.astype(jnp.bfloat16), w_c2_ref[...],
                     preferred_element_type=jnp.float32) + b_c2_ref[...]

    # ---- per-example cross-entropy (f32, numerically stable).
    m = jnp.max(logits, axis=-1, keepdims=True)
    lse = m + jnp.log(jnp.sum(jnp.exp(logits - m), axis=-1, keepdims=True))
    col = jax.lax.broadcasted_iota(jnp.int32, logits.shape, 1)
    one_hot = (col == labels_ref[...]).astype(jnp.float32)
    picked = jnp.sum(one_hot * logits, axis=-1, keepdims=True)
    nll = lse - picked                                          # [tb, 1]

    # Fold the NLL into spare padded lane `num_labels` of the lane-dense slab:
    # no (tb,1) masked-store output stream.
    out_ref[...] = jnp.where(col == num_labels, nll, logits)


def prepare_head_params(params, h1, h2, num_labels):
    """One-time weight preprocessing (hoisted out of the per-call path):
    bf16 MXU weights, classifier_1 split, 128-lane padding, f32 -1e30 bias pad."""
    h1p, h2p = _round_up(h1, 128), _round_up(h2, 128)
    hc = h1 + h2
    hcp = _round_up(hc, 128)
    lpad = _round_up(num_labels + 1, 128)   # +1 spare lane carries per-example NLL

    def pad_w(w, rows, cols):
        out = jnp.zeros((rows, cols), jnp.bfloat16)
        return out.at[:w.shape[0], :w.shape[1]].set(w.astype(jnp.bfloat16))

    def pad_b(b_, cols, fill=0.0):
        out = jnp.full((1, cols), jnp.float32(fill))
        return out.at[:, :b_.shape[-1]].set(b_.reshape(1, -1).astype(jnp.float32))

    prepped = {
        "w_pre1": pad_w(params["w_pre1"], h1p, h1p),
        "b_pre1": pad_b(params["b_pre1"], h1p),
        "w_pre2": pad_w(params["w_pre2"], h2p, h2p),
        "b_pre2": pad_b(params["b_pre2"], h2p),
        "w_c1a":  pad_w(params["w_c1"][:h1, :], h1p, hcp),
        "w_c1b":  pad_w(params["w_c1"][h1:, :], h2p, hcp),
        "b_c1":   pad_b(params["b_c1"], hcp),
        "w_c2":   pad_w(params["w_c2"], hcp, lpad),
        # NOTE: pad bias must stay f32; -1e30 cast to bf16 becomes -inf and
        # 0*(-inf) would poison the picked-logit sum.
        "b_c2":   pad_b(params["b_c2"], lpad, fill=-1e30),
    }
    dims = {"h1": h1, "h2": h2, "h1p": h1p, "h2p": h2p, "hcp": hcp,
            "lpad": lpad, "num_labels": num_labels}
    return prepped, dims


def two_body_head(cls1, cls2, labels, prepped, dims, *, tb=None, compute_dtype=None):
    """TwoBodyModel classifier head + cross-entropy loss as one Pallas kernel."""
    b = cls1.shape[0]
    h1, h2 = dims["h1"], dims["h2"]
    h1p, h2p, hcp, lpad = dims["h1p"], dims["h2p"], dims["hcp"], dims["lpad"]
    num_labels = dims["num_labels"]

    if compute_dtype is None:
        compute_dtype = _default_compute_dtype()

    # Batch tile: keep >= 2 grid steps when the batch allows it (v7x megacore);
    # 256 also fits comfortably in v5e's tighter scoped-VMEM budget.
    if tb is None:
        if b >= 512 and b % 256 == 0:
            tb = 256
        elif b >= 256 and b % 128 == 0:
            tb = 128
        else:
            tb = b
    assert b % tb == 0, "batch must be divisible by the batch tile"
    grid_n = b // tb

    # Zero-pad activation lane widths to 128-multiples (no-op when already aligned).
    cls1p = cls1 if h1 == h1p else jnp.zeros((b, h1p), cls1.dtype).at[:, :h1].set(cls1)
    cls2p = cls2 if h2 == h2p else jnp.zeros((b, h2p), cls2.dtype).at[:, :h2].set(cls2)
    labels2d = labels.reshape(b, 1).astype(jnp.int32)

    # Advisory cost estimate for XLA scheduling around the kernel.
    mm_flops = 2 * b * (h1p * h1p + h2p * h2p + h1p * hcp + h2p * hcp + hcp * lpad)
    transcendentals = b * (2 * h1p + 2 * h2p + hcp + lpad + 1)
    weight_bytes = (2 * (h1p * h1p + h2p * h2p + h1p * hcp + h2p * hcp + hcp * lpad)
                    + 4 * (h1p + h2p + hcp + lpad))
    io_bytes = 4 * b * (h1p + h2p + 1 + lpad) + weight_bytes
    cost = pl.CostEstimate(flops=mm_flops, transcendentals=transcendentals,
                           bytes_accessed=io_bytes)

    # Explicit VMEM budget: double-buffered activations + single-buffered weights.
    act_bytes = 4 * tb * (h1p + h2p + 1 + lpad)
    vmem_limit = int(min(64 << 20, max(2 * (2 * act_bytes + weight_bytes) + (8 << 20),
                                       32 << 20)))

    row = lambda i: (i, 0)        # batch-tiled operands
    rep = lambda i: (0, 0)        # VMEM-resident weights/biases (same block every step)

    kernel = functools.partial(head_kernel, num_labels=num_labels,
                               compute_dtype=compute_dtype)

    def make_call(single_buffer_weights):
        wkw = ({"pipeline_mode": pl.Buffered(1)} if single_buffer_weights else {})
        wspec = lambda shape: pl.BlockSpec(shape, rep, **wkw)
        return pl.pallas_call(
            kernel,
            grid=(grid_n,),
            out_shape=jax.ShapeDtypeStruct((b, lpad), jnp.float32),
            in_specs=[
                pl.BlockSpec((tb, h1p), row),
                pl.BlockSpec((tb, h2p), row),
                pl.BlockSpec((tb, 1), row),
                wspec((h1p, h1p)), wspec((1, h1p)),
                wspec((h2p, h2p)), wspec((1, h2p)),
                wspec((h1p, hcp)), wspec((h2p, hcp)), wspec((1, hcp)),
                wspec((hcp, lpad)), wspec((1, lpad)),
            ],
            out_specs=pl.BlockSpec((tb, lpad), row),
            compiler_params=pltpu.CompilerParams(
                dimension_semantics=("parallel",),
                vmem_limit_bytes=vmem_limit),
            cost_estimate=cost,
        )

    operands = (cls1p, cls2p, labels2d,
                prepped["w_pre1"], prepped["b_pre1"],
                prepped["w_pre2"], prepped["b_pre2"],
                prepped["w_c1a"], prepped["w_c1b"], prepped["b_c1"],
                prepped["w_c2"], prepped["b_c2"])

    try:
        out = make_call(True)(*operands)
    except Exception:
        # pl.Buffered(1) not accepted on this jax build -> default buffering.
        out = make_call(False)(*operands)

    logits = out[:, :num_labels]
    nll = out[:, num_labels]

    # Batch mean with CrossEntropyLoss(ignore_index=-100) semantics.
    # TODO(synk): labels outside [0, num_labels) other than -100 yield nll=lse
    # instead of raising like PyTorch.
    valid = (labels != -100).astype(jnp.float32)
    n_valid = jnp.maximum(jnp.sum(valid), 1.0)
    loss = jnp.sum(nll * valid) / n_valid
    return loss, logits


def toy_encoder(input_ids, attention_mask, emb):
    """Deterministic stand-in for AutoModel: embedding lookup + masked mean pool.
    Returns the [B, H] features that play the role of last_hidden_state[:, 0, :]."""
    tok = emb[input_ids]                                        # [B, S, H]
    mask = attention_mask[..., None].astype(jnp.float32)
    pooled = (tok * mask).sum(axis=1) / jnp.maximum(mask.sum(axis=1), 1.0)
    return tok[:, 0, :] + pooled                                # [B, H]


def init_params(key, h1, h2, num_labels):
    ks = jax.random.split(key, 8)
    s = lambda fan_in: 1.0 / jnp.sqrt(jnp.float32(fan_in))
    return {
        "w_pre1": jax.random.normal(ks[0], (h1, h1), jnp.float32) * s(h1),
        "b_pre1": jax.random.normal(ks[1], (1, h1), jnp.float32) * 0.01,
        "w_pre2": jax.random.normal(ks[2], (h2, h2), jnp.float32) * s(h2),
        "b_pre2": jax.random.normal(ks[3], (1, h2), jnp.float32) * 0.01,
        "w_c1":   jax.random.normal(ks[4], (h1 + h2, h1 + h2), jnp.float32) * s(h1 + h2),
        "b_c1":   jax.random.normal(ks[5], (1, h1 + h2), jnp.float32) * 0.01,
        "w_c2":   jax.random.normal(ks[6], (h1 + h2, num_labels), jnp.float32) * s(h1 + h2),
        "b_c2":   jax.random.normal(ks[7], (1, num_labels), jnp.float32) * 0.01,
    }


if __name__ == "__main__":
    B, S, VOCAB = 2, 8, 50
    H1, H2, NUM_LABELS = 32, 48, 4

    root = jax.random.PRNGKey(0)
    k_emb1, k_emb2, k_ids1, k_ids2, k_lbl, k_par = jax.random.split(root, 6)

    emb1 = jax.random.normal(k_emb1, (VOCAB, H1), jnp.float32) * 0.1
    emb2 = jax.random.normal(k_emb2, (VOCAB, H2), jnp.float32) * 0.1

    input_ids_1 = jax.random.randint(k_ids1, (B, S), 0, VOCAB, jnp.int32)
    input_ids_2 = jax.random.randint(k_ids2, (B, S), 0, VOCAB, jnp.int32)
    attention_mask_1 = jnp.ones((B, S), jnp.int32)
    attention_mask_2 = jnp.ones((B, S), jnp.int32)
    labels = jax.random.randint(k_lbl, (B,), 0, NUM_LABELS, jnp.int32)

    params = init_params(k_par, H1, H2, NUM_LABELS)
    prepped, dims = prepare_head_params(params, H1, H2, NUM_LABELS)  # one-time

    # backbone stand-ins (plain JAX glue)
    cls_1 = toy_encoder(input_ids_1, attention_mask_1, emb1)    # [B, H1]
    cls_2 = toy_encoder(input_ids_2, attention_mask_2, emb2)    # [B, H2]

    loss, logits = two_body_head(cls_1, cls_2, labels, prepped, dims)
    jax.block_until_ready((loss, logits))

    assert logits.shape == (B, NUM_LABELS) and logits.dtype == jnp.float32
    assert loss.shape == () and bool(jnp.isfinite(loss))
    print("KERNEL_OK")
</pallas_src>

<mosaic_0001>
module attributes {stable_mosaic.version = 11 : i64} {
  func.func @head_kernel(%arg0: i32, %arg1: memref<2x128xf32, #tpu.memory_space<vmem>>, %arg2: memref<2x128xf32, #tpu.memory_space<vmem>>, %arg3: memref<2x1xi32, #tpu.memory_space<vmem>>, %arg4: memref<128x128xbf16, #tpu.memory_space<vmem>>, %arg5: memref<1x128xf32, #tpu.memory_space<vmem>>, %arg6: memref<128x128xbf16, #tpu.memory_space<vmem>>, %arg7: memref<1x128xf32, #tpu.memory_space<vmem>>, %arg8: memref<128x128xbf16, #tpu.memory_space<vmem>>, %arg9: memref<128x128xbf16, #tpu.memory_space<vmem>>, %arg10: memref<1x128xf32, #tpu.memory_space<vmem>>, %arg11: memref<128x128xbf16, #tpu.memory_space<vmem>>, %arg12: memref<1x128xf32, #tpu.memory_space<vmem>>, %arg13: memref<2x128xf32, #tpu.memory_space<vmem>>) attributes {dimension_semantics = [#tpu.dimension_semantics<parallel>], iteration_bounds = array<i64: 1>, scalar_prefetch = 0 : i64, scratch_operands = 0 : i64, tpu.core_type = #tpu.core_type<tc>, window_params = [{transform_indices = @transform_0, window_bounds = array<i64: 2, 128>}, {transform_indices = @transform_1, window_bounds = array<i64: 2, 128>}, {transform_indices = @transform_2, window_bounds = array<i64: 2, 1>}, {pipeline_mode = #tpu.pipeline_mode<synchronous>, transform_indices = @transform_3, window_bounds = array<i64: 128, 128>}, {pipeline_mode = #tpu.pipeline_mode<synchronous>, transform_indices = @transform_4, window_bounds = array<i64: 1, 128>}, {pipeline_mode = #tpu.pipeline_mode<synchronous>, transform_indices = @transform_5, window_bounds = array<i64: 128, 128>}, {pipeline_mode = #tpu.pipeline_mode<synchronous>, transform_indices = @transform_6, window_bounds = array<i64: 1, 128>}, {pipeline_mode = #tpu.pipeline_mode<synchronous>, transform_indices = @transform_7, window_bounds = array<i64: 128, 128>}, {pipeline_mode = #tpu.pipeline_mode<synchronous>, transform_indices = @transform_8, window_bounds = array<i64: 128, 128>}, {pipeline_mode = #tpu.pipeline_mode<synchronous>, transform_indices = @transform_9, window_bounds = array<i64: 1, 128>}, {pipeline_mode = #tpu.pipeline_mode<synchronous>, transform_indices = @transform_10, window_bounds = array<i64: 128, 128>}, {pipeline_mode = #tpu.pipeline_mode<synchronous>, transform_indices = @transform_11, window_bounds = array<i64: 1, 128>}, {transform_indices = @transform_12, window_bounds = array<i64: 2, 128>}]} {
    %c0 = arith.constant 0 : index
    %c0_0 = arith.constant 0 : index
    %0 = vector.load %arg1[%c0, %c0_0] : memref<2x128xf32, #tpu.memory_space<vmem>>, vector<2x128xf32>
    %cst = arith.constant 5.000000e-01 : f32
    %1 = vector.broadcast %cst : f32 to vector<2x128xf32>
    %2 = arith.mulf %1, %0 : vector<2x128xf32>
    %cst_1 = arith.constant 4.471500e-02 : f32
    %3 = vector.broadcast %cst_1 : f32 to vector<2x128xf32>
    %4 = arith.mulf %3, %0 : vector<2x128xf32>
    %5 = arith.mulf %4, %0 : vector<2x128xf32>
    %6 = arith.mulf %5, %0 : vector<2x128xf32>
    %7 = arith.addf %0, %6 : vector<2x128xf32>
    %cst_2 = arith.constant 0.797884583 : f32
    %8 = vector.broadcast %cst_2 : f32 to vector<2x128xf32>
    %9 = arith.mulf %8, %7 : vector<2x128xf32>
    %10 = math.tanh %9 : vector<2x128xf32>
    %cst_3 = arith.constant 1.000000e+00 : f32
    %11 = vector.broadcast %cst_3 : f32 to vector<2x128xf32>
    %12 = arith.addf %11, %10 : vector<2x128xf32>
    %13 = arith.mulf %2, %12 : vector<2x128xf32>
    %c0_4 = arith.constant 0 : index
    %c0_5 = arith.constant 0 : index
    %14 = vector.load %arg2[%c0_4, %c0_5] : memref<2x128xf32, #tpu.memory_space<vmem>>, vector<2x128xf32>
    %cst_6 = arith.constant 5.000000e-01 : f32
    %15 = vector.broadcast %cst_6 : f32 to vector<2x128xf32>
    %16 = arith.mulf %15, %14 : vector<2x128xf32>
    %cst_7 = arith.constant 4.471500e-02 : f32
    %17 = vector.broadcast %cst_7 : f32 to vector<2x128xf32>
    %18 = arith.mulf %17, %14 : vector<2x128xf32>
    %19 = arith.mulf %18, %14 : vector<2x128xf32>
    %20 = arith.mulf %19, %14 : vector<2x128xf32>
    %21 = arith.addf %14, %20 : vector<2x128xf32>
    %cst_8 = arith.constant 0.797884583 : f32
    %22 = vector.broadcast %cst_8 : f32 to vector<2x128xf32>
    %23 = arith.mulf %22, %21 : vector<2x128xf32>
    %24 = math.tanh %23 : vector<2x128xf32>
    %cst_9 = arith.constant 1.000000e+00 : f32
    %25 = vector.broadcast %cst_9 : f32 to vector<2x128xf32>
    %26 = arith.addf %25, %24 : vector<2x128xf32>
    %27 = arith.mulf %16, %26 : vector<2x128xf32>
    %28 = arith.truncf %13 : vector<2x128xf32> to vector<2x128xbf16>
    %c0_10 = arith.constant 0 : index
    %c0_11 = arith.constant 0 : index
    %29 = vector.load %arg4[%c0_10, %c0_11] : memref<128x128xbf16, #tpu.memory_space<vmem>>, vector<128x128xbf16>
    %cst_12 = arith.constant dense<0.000000e+00> : vector<2x128xf32>
    %30 = tpu.matmul %28, %29, %cst_12 {dimension_numbers = #tpu.dot_dimension_numbers<[1], [0], [0], [1], [0, 0, 1, 1], [], []>} : vector<2x128xbf16>, vector<128x128xbf16>, vector<2x128xf32> -> vector<2x128xf32>
    %c0_13 = arith.constant 0 : index
    %c0_14 = arith.constant 0 : index
    %31 = vector.load %arg5[%c0_13, %c0_14] : memref<1x128xf32, #tpu.memory_space<vmem>>, vector<1x128xf32>
    %32 = vector.broadcast %31 : vector<1x128xf32> to vector<2x128xf32>
    %33 = arith.addf %30, %32 : vector<2x128xf32>
    %cst_15 = arith.constant 5.000000e-01 : f32
    %34 = vector.broadcast %cst_15 : f32 to vector<2x128xf32>
    %35 = arith.mulf %34, %33 : vector<2x128xf32>
    %cst_16 = arith.constant 4.471500e-02 : f32
    %36 = vector.broadcast %cst_16 : f32 to vector<2x128xf32>
    %37 = arith.mulf %36, %33 : vector<2x128xf32>
    %38 = arith.mulf %37, %33 : vector<2x128xf32>
    %39 = arith.mulf %38, %33 : vector<2x128xf32>
    %40 = arith.addf %33, %39 : vector<2x128xf32>
    %cst_17 = arith.constant 0.797884583 : f32
    %41 = vector.broadcast %cst_17 : f32 to vector<2x128xf32>
    %42 = arith.mulf %41, %40 : vector<2x128xf32>
    %43 = math.tanh %42 : vector<2x128xf32>
    %cst_18 = arith.constant 1.000000e+00 : f32
    %44 = vector.broadcast %cst_18 : f32 to vector<2x128xf32>
    %45 = arith.addf %44, %43 : vector<2x128xf32>
    %46 = arith.mulf %35, %45 : vector<2x128xf32>
    %47 = arith.truncf %27 : vector<2x128xf32> to vector<2x128xbf16>
    %c0_19 = arith.constant 0 : index
    %c0_20 = arith.constant 0 : index
    %48 = vector.load %arg6[%c0_19, %c0_20] : memref<128x128xbf16, #tpu.memory_space<vmem>>, vector<128x128xbf16>
    %cst_21 = arith.constant dense<0.000000e+00> : vector<2x128xf32>
    %49 = tpu.matmul %47, %48, %cst_21 {dimension_numbers = #tpu.dot_dimension_numbers<[1], [0], [0], [1], [0, 0, 1, 1], [], []>} : vector<2x128xbf16>, vector<128x128xbf16>, vector<2x128xf32> -> vector<2x128xf32>
    %c0_22 = arith.constant 0 : index
    %c0_23 = arith.constant 0 : index
    %50 = vector.load %arg7[%c0_22, %c0_23] : memref<1x128xf32, #tpu.memory_space<vmem>>, vector<1x128xf32>
    %51 = vector.broadcast %50 : vector<1x128xf32> to vector<2x128xf32>
    %52 = arith.addf %49, %51 : vector<2x128xf32>
    %cst_24 = arith.constant 5.000000e-01 : f32
    %53 = vector.broadcast %cst_24 : f32 to vector<2x128xf32>
    %54 = arith.mulf %53, %52 : vector<2x128xf32>
    %cst_25 = arith.constant 4.471500e-02 : f32
    %55 = vector.broadcast %cst_25 : f32 to vector<2x128xf32>
    %56 = arith.mulf %55, %52 : vector<2x128xf32>
    %57 = arith.mulf %56, %52 : vector<2x128xf32>
    %58 = arith.mulf %57, %52 : vector<2x128xf32>
    %59 = arith.addf %52, %58 : vector<2x128xf32>
    %cst_26 = arith.constant 0.797884583 : f32
    %60 = vector.broadcast %cst_26 : f32 to vector<2x128xf32>
    %61 = arith.mulf %60, %59 : vector<2x128xf32>
    %62 = math.tanh %61 : vector<2x128xf32>
    %cst_27 = arith.constant 1.000000e+00 : f32
    %63 = vector.broadcast %cst_27 : f32 to vector<2x128xf32>
    %64 = arith.addf %63, %62 : vector<2x128xf32>
    %65 = arith.mulf %54, %64 : vector<2x128xf32>
    %66 = arith.truncf %46 : vector<2x128xf32> to vector<2x128xbf16>
    %c0_28 = arith.constant 0 : index
    %c0_29 = arith.constant 0 : index
    %67 = vector.load %arg8[%c0_28, %c0_29] : memref<128x128xbf16, #tpu.memory_space<vmem>>, vector<128x128xbf16>
    %cst_30 = arith.constant dense<0.000000e+00> : vector<2x128xf32>
    %68 = tpu.matmul %66, %67, %cst_30 {dimension_numbers = #tpu.dot_dimension_numbers<[1], [0], [0], [1], [0, 0, 1, 1], [], []>} : vector<2x128xbf16>, vector<128x128xbf16>, vector<2x128xf32> -> vector<2x128xf32>
    %69 = arith.truncf %65 : vector<2x128xf32> to vector<2x128xbf16>
    %c0_31 = arith.constant 0 : index
    %c0_32 = arith.constant 0 : index
    %70 = vector.load %arg9[%c0_31, %c0_32] : memref<128x128xbf16, #tpu.memory_space<vmem>>, vector<128x128xbf16>
    %cst_33 = arith.constant dense<0.000000e+00> : vector<2x128xf32>
    %71 = tpu.matmul %69, %70, %cst_33 {dimension_numbers = #tpu.dot_dimension_numbers<[1], [0], [0], [1], [0, 0, 1, 1], [], []>} : vector<2x128xbf16>, vector<128x128xbf16>, vector<2x128xf32> -> vector<2x128xf32>
    %72 = arith.addf %68, %71 : vector<2x128xf32>
    %c0_34 = arith.constant 0 : index
    %c0_35 = arith.constant 0 : index
    %73 = vector.load %arg10[%c0_34, %c0_35] : memref<1x128xf32, #tpu.memory_space<vmem>>, vector<1x128xf32>
    %74 = vector.broadcast %73 : vector<1x128xf32> to vector<2x128xf32>
    %75 = arith.addf %72, %74 : vector<2x128xf32>
    %cst_36 = arith.constant 5.000000e-01 : f32
    %76 = vector.broadcast %cst_36 : f32 to vector<2x128xf32>
    %77 = arith.mulf %76, %75 : vector<2x128xf32>
    %cst_37 = arith.constant 4.471500e-02 : f32
    %78 = vector.broadcast %cst_37 : f32 to vector<2x128xf32>
    %79 = arith.mulf %78, %75 : vector<2x128xf32>
    %80 = arith.mulf %79, %75 : vector<2x128xf32>
    %81 = arith.mulf %80, %75 : vector<2x128xf32>
    %82 = arith.addf %75, %81 : vector<2x128xf32>
    %cst_38 = arith.constant 0.797884583 : f32
    %83 = vector.broadcast %cst_38 : f32 to vector<2x128xf32>
    %84 = arith.mulf %83, %82 : vector<2x128xf32>
    %85 = math.tanh %84 : vector<2x128xf32>
    %cst_39 = arith.constant 1.000000e+00 : f32
    %86 = vector.broadcast %cst_39 : f32 to vector<2x128xf32>
    %87 = arith.addf %86, %85 : vector<2x128xf32>
    %88 = arith.mulf %77, %87 : vector<2x128xf32>
    %89 = arith.truncf %88 : vector<2x128xf32> to vector<2x128xbf16>
    %c0_40 = arith.constant 0 : index
    %c0_41 = arith.constant 0 : index
    %90 = vector.load %arg11[%c0_40, %c0_41] : memref<128x128xbf16, #tpu.memory_space<vmem>>, vector<128x128xbf16>
    %cst_42 = arith.constant dense<0.000000e+00> : vector<2x128xf32>
    %91 = tpu.matmul %89, %90, %cst_42 {dimension_numbers = #tpu.dot_dimension_numbers<[1], [0], [0], [1], [0, 0, 1, 1], [], []>} : vector<2x128xbf16>, vector<128x128xbf16>, vector<2x128xf32> -> vector<2x128xf32>
    %c0_43 = arith.constant 0 : index
    %c0_44 = arith.constant 0 : index
    %92 = vector.load %arg12[%c0_43, %c0_44] : memref<1x128xf32, #tpu.memory_space<vmem>>, vector<1x128xf32>
    %93 = vector.broadcast %92 : vector<1x128xf32> to vector<2x128xf32>
    %94 = arith.addf %91, %93 : vector<2x128xf32>
    %cst_45 = arith.constant dense<0xFF800000> : vector<2xf32>
    %95 = vector.multi_reduction <maximumf>, %94, %cst_45 [1] : vector<2x128xf32> to vector<2xf32>
    %96 = vector.shape_cast %95 : vector<2xf32> to vector<2x1xf32>
    %97 = vector.broadcast %96 : vector<2x1xf32> to vector<2x128xf32>
    %98 = arith.subf %94, %97 : vector<2x128xf32>
    %99 = math.exp %98 : vector<2x128xf32>
    %cst_46 = arith.constant dense<0.000000e+00> : vector<2xf32>
    %100 = vector.multi_reduction <add>, %99, %cst_46 [1] : vector<2x128xf32> to vector<2xf32>
    %101 = vector.shape_cast %100 : vector<2xf32> to vector<2x1xf32>
    %102 = math.log %101 : vector<2x1xf32>
    %103 = arith.addf %96, %102 : vector<2x1xf32>
    %104 = tpu.iota {dimensions = array<i32: 1>} : vector<2x128xi32>
    %c0_47 = arith.constant 0 : index
    %c0_48 = arith.constant 0 : index
    %105 = vector.load %arg3[%c0_47, %c0_48] : memref<2x1xi32, #tpu.memory_space<vmem>>, vector<2x1xi32>
    %106 = vector.broadcast %105 : vector<2x1xi32> to vector<2x128xi32>
    %107 = arith.cmpi eq, %104, %106 : vector<2x128xi32>
    %108 = arith.extui %107 : vector<2x128xi1> to vector<2x128xi32>
    %109 = arith.sitofp %108 : vector<2x128xi32> to vector<2x128xf32>
    %110 = arith.mulf %109, %94 : vector<2x128xf32>
    %cst_49 = arith.constant dense<0.000000e+00> : vector<2xf32>
    %111 = vector.multi_reduction <add>, %110, %cst_49 [1] : vector<2x128xf32> to vector<2xf32>
    %112 = vector.shape_cast %111 : vector<2xf32> to vector<2x1xf32>
    %113 = arith.subf %103, %112 : vector<2x1xf32>
    %c4_i32 = arith.constant 4 : i32
    %114 = vector.broadcast %c4_i32 : i32 to vector<2x128xi32>
    %115 = arith.cmpi eq, %104, %114 : vector<2x128xi32>
    %116 = vector.shape_cast %113 : vector<2x1xf32> to vector<2x1xf32>
    %117 = vector.broadcast %116 : vector<2x1xf32> to vector<2x128xf32>
    %118 = arith.select %115, %117, %94 : vector<2x128xi1>, vector<2x128xf32>
    %c0_50 = arith.constant 0 : index
    %c0_51 = arith.constant 0 : index
    %119 = vector.load %arg13[%c0_50, %c0_51] : memref<2x128xf32, #tpu.memory_space<vmem>>, vector<2x128xf32>
    tpu.vector_store %arg13[%c0_50, %c0_51], %118 {strides = array<i32>} : memref<2x128xf32, #tpu.memory_space<vmem>>, vector<2x128xf32>,
    return
  }
  func.func @transform_0(%arg0: i32) -> (i32, i32) {
    %c0_i32 = arith.constant 0 : i32
    %c0_i32_0 = arith.constant 0 : i32
    return %arg0, %c0_i32 : i32, i32
  }
  func.func @transform_1(%arg0: i32) -> (i32, i32) {
    %c0_i32 = arith.constant 0 : i32
    %c0_i32_0 = arith.constant 0 : i32
    return %arg0, %c0_i32 : i32, i32
  }
  func.func @transform_2(%arg0: i32) -> (i32, i32) {
    %c0_i32 = arith.constant 0 : i32
    %c0_i32_0 = arith.constant 0 : i32
    return %arg0, %c0_i32 : i32, i32
  }
  func.func @transform_3(%arg0: i32) -> (i32, i32) {
    %c0_i32 = arith.constant 0 : i32
    %c0_i32_0 = arith.constant 0 : i32
    %c0_i32_1 = arith.constant 0 : i32
    return %c0_i32, %c0_i32_0 : i32, i32
  }
  func.func @transform_4(%arg0: i32) -> (i32, i32) {
    %c0_i32 = arith.constant 0 : i32
    %c0_i32_0 = arith.constant 0 : i32
    %c0_i32_1 = arith.constant 0 : i32
    return %c0_i32, %c0_i32_0 : i32, i32
  }
  func.func @transform_5(%arg0: i32) -> (i32, i32) {
    %c0_i32 = arith.constant 0 : i32
    %c0_i32_0 = arith.constant 0 : i32
    %c0_i32_1 = arith.constant 0 : i32
    return %c0_i32, %c0_i32_0 : i32, i32
  }
  func.func @transform_6(%arg0: i32) -> (i32, i32) {
    %c0_i32 = arith.constant 0 : i32
    %c0_i32_0 = arith.constant 0 : i32
    %c0_i32_1 = arith.constant 0 : i32
    return %c0_i32, %c0_i32_0 : i32, i32
  }
  func.func @transform_7(%arg0: i32) -> (i32, i32) {
    %c0_i32 = arith.constant 0 : i32
    %c0_i32_0 = arith.constant 0 : i32
    %c0_i32_1 = arith.constant 0 : i32
    return %c0_i32, %c0_i32_0 : i32, i32
  }
  func.func @transform_8(%arg0: i32) -> (i32, i32) {
    %c0_i32 = arith.constant 0 : i32
    %c0_i32_0 = arith.constant 0 : i32
    %c0_i32_1 = arith.constant 0 : i32
    return %c0_i32, %c0_i32_0 : i32, i32
  }
  func.func @transform_9(%arg0: i32) -> (i32, i32) {
    %c0_i32 = arith.constant 0 : i32
    %c0_i32_0 = arith.constant 0 : i32
    %c0_i32_1 = arith.constant 0 : i32
    return %c0_i32, %c0_i32_0 : i32, i32
  }
  func.func @transform_10(%arg0: i32) -> (i32, i32) {
    %c0_i32 = arith.constant 0 : i32
    %c0_i32_0 = arith.constant 0 : i32
    %c0_i32_1 = arith.constant 0 : i32
    return %c0_i32, %c0_i32_0 : i32, i32
  }
  func.func @transform_11(%arg0: i32) -> (i32, i32) {
    %c0_i32 = arith.constant 0 : i32
    %c0_i32_0 = arith.constant 0 : i32
    %c0_i32_1 = arith.constant 0 : i32
    return %c0_i32, %c0_i32_0 : i32, i32
  }
  func.func @transform_12(%arg0: i32) -> (i32, i32) {
    %c0_i32 = arith.constant 0 : i32
    %c0_i32_0 = arith.constant 0 : i32
    return %arg0, %c0_i32 : i32, i32
  }
}

module attributes {stable_mosaic.version = 11 : i64} {
  func.func @head_kernel(%arg0: i32, %arg1: memref<2x128xf32, #tpu.memory_space<vmem>>, %arg2: memref<2x128xf32, #tpu.memory_space<vmem>>, %arg3: memref<2x1xi32, #tpu.memory_space<vmem>>, %arg4: memref<128x128xbf16, #tpu.memory_space<vmem>>, %arg5: memref<1x128xf32, #tpu.memory_space<vmem>>, %arg6: memref<128x128xbf16, #tpu.memory_space<vmem>>, %arg7: memref<1x128xf32, #tpu.memory_space<vmem>>, %arg8: memref<128x128xbf16, #tpu.memory_space<vmem>>, %arg9: memref<128x128xbf16, #tpu.memory_space<vmem>>, %arg10: memref<1x128xf32, #tpu.memory_space<vmem>>, %arg11: memref<128x128xbf16, #tpu.memory_space<vmem>>, %arg12: memref<1x128xf32, #tpu.memory_space<vmem>>, %arg13: memref<2x128xf32, #tpu.memory_space<vmem>>) attributes {dimension_semantics = [#tpu.dimension_semantics<parallel>], iteration_bounds = array<i64: 1>, scalar_prefetch = 0 : i64, scratch_operands = 0 : i64, tpu.core_type = #tpu.core_type<tc>, window_params = [{transform_indices = @transform_0, window_bounds = array<i64: 2, 128>}, {transform_indices = @transform_1, window_bounds = array<i64: 2, 128>}, {transform_indices = @transform_2, window_bounds = array<i64: 2, 1>}, {pipeline_mode = #tpu.pipeline_mode<synchronous>, transform_indices = @transform_3, window_bounds = array<i64: 128, 128>}, {pipeline_mode = #tpu.pipeline_mode<synchronous>, transform_indices = @transform_4, window_bounds = array<i64: 1, 128>}, {pipeline_mode = #tpu.pipeline_mode<synchronous>, transform_indices = @transform_5, window_bounds = array<i64: 128, 128>}, {pipeline_mode = #tpu.pipeline_mode<synchronous>, transform_indices = @transform_6, window_bounds = array<i64: 1, 128>}, {pipeline_mode = #tpu.pipeline_mode<synchronous>, transform_indices = @transform_7, window_bounds = array<i64: 128, 128>}, {pipeline_mode = #tpu.pipeline_mode<synchronous>, transform_indices = @transform_8, window_bounds = array<i64: 128, 128>}, {pipeline_mode = #tpu.pipeline_mode<synchronous>, transform_indices = @transform_9, window_bounds = array<i64: 1, 128>}, {pipeline_mode = #tpu.pipeline_mode<synchronous>, transform_indices = @transform_10, window_bounds = array<i64: 128, 128>}, {pipeline_mode = #tpu.pipeline_mode<synchronous>, transform_indices = @transform_11, window_bounds = array<i64: 1, 128>}, {transform_indices = @transform_12, window_bounds = array<i64: 2, 128>}]} {
    %c0 = arith.constant 0 : index
    %c0_0 = arith.constant 0 : index
    %0 = vector.load %arg1[%c0, %c0_0] : memref<2x128xf32, #tpu.memory_space<vmem>>, vector<2x128xf32>
    %cst = arith.constant 5.000000e-01 : f32
    %1 = vector.broadcast %cst : f32 to vector<2x128xf32>
    %2 = arith.mulf %1, %0 : vector<2x128xf32>
    %cst_1 = arith.constant 4.471500e-02 : f32
    %3 = vector.broadcast %cst_1 : f32 to vector<2x128xf32>
    %4 = arith.mulf %3, %0 : vector<2x128xf32>
    %5 = arith.mulf %4, %0 : vector<2x128xf32>
    %6 = arith.mulf %5, %0 : vector<2x128xf32>
    %7 = arith.addf %0, %6 : vector<2x128xf32>
    %cst_2 = arith.constant 0.797884583 : f32
    %8 = vector.broadcast %cst_2 : f32 to vector<2x128xf32>
    %9 = arith.mulf %8, %7 : vector<2x128xf32>
    %10 = math.tanh %9 : vector<2x128xf32>
    %cst_3 = arith.constant 1.000000e+00 : f32
    %11 = vector.broadcast %cst_3 : f32 to vector<2x128xf32>
    %12 = arith.addf %11, %10 : vector<2x128xf32>
    %13 = arith.mulf %2, %12 : vector<2x128xf32>
    %c0_4 = arith.constant 0 : index
    %c0_5 = arith.constant 0 : index
    %14 = vector.load %arg2[%c0_4, %c0_5] : memref<2x128xf32, #tpu.memory_space<vmem>>, vector<2x128xf32>
    %cst_6 = arith.constant 5.000000e-01 : f32
    %15 = vector.broadcast %cst_6 : f32 to vector<2x128xf32>
    %16 = arith.mulf %15, %14 : vector<2x128xf32>
    %cst_7 = arith.constant 4.471500e-02 : f32
    %17 = vector.broadcast %cst_7 : f32 to vector<2x128xf32>
    %18 = arith.mulf %17, %14 : vector<2x128xf32>
    %19 = arith.mulf %18, %14 : vector<2x128xf32>
    %20 = arith.mulf %19, %14 : vector<2x128xf32>
    %21 = arith.addf %14, %20 : vector<2x128xf32>
    %cst_8 = arith.constant 0.797884583 : f32
    %22 = vector.broadcast %cst_8 : f32 to vector<2x128xf32>
    %23 = arith.mulf %22, %21 : vector<2x128xf32>
    %24 = math.tanh %23 : vector<2x128xf32>
    %cst_9 = arith.constant 1.000000e+00 : f32
    %25 = vector.broadcast %cst_9 : f32 to vector<2x128xf32>
    %26 = arith.addf %25, %24 : vector<2x128xf32>
    %27 = arith.mulf %16, %26 : vector<2x128xf32>
    %28 = arith.truncf %13 : vector<2x128xf32> to vector<2x128xbf16>
    %c0_10 = arith.constant 0 : index
    %c0_11 = arith.constant 0 : index
    %29 = vector.load %arg4[%c0_10, %c0_11] : memref<128x128xbf16, #tpu.memory_space<vmem>>, vector<128x128xbf16>
    %cst_12 = arith.constant dense<0.000000e+00> : vector<2x128xf32>
    %30 = tpu.matmul %28, %29, %cst_12 {dimension_numbers = #tpu.dot_dimension_numbers<[1], [0], [0], [1], [0, 0, 1, 1], [], []>} : vector<2x128xbf16>, vector<128x128xbf16>, vector<2x128xf32> -> vector<2x128xf32>
    %c0_13 = arith.constant 0 : index
    %c0_14 = arith.constant 0 : index
    %31 = vector.load %arg5[%c0_13, %c0_14] : memref<1x128xf32, #tpu.memory_space<vmem>>, vector<1x128xf32>
    %32 = vector.broadcast %31 : vector<1x128xf32> to vector<2x128xf32>
    %33 = arith.addf %30, %32 : vector<2x128xf32>
    %cst_15 = arith.constant 5.000000e-01 : f32
    %34 = vector.broadcast %cst_15 : f32 to vector<2x128xf32>
    %35 = arith.mulf %34, %33 : vector<2x128xf32>
    %cst_16 = arith.constant 4.471500e-02 : f32
    %36 = vector.broadcast %cst_16 : f32 to vector<2x128xf32>
    %37 = arith.mulf %36, %33 : vector<2x128xf32>
    %38 = arith.mulf %37, %33 : vector<2x128xf32>
    %39 = arith.mulf %38, %33 : vector<2x128xf32>
    %40 = arith.addf %33, %39 : vector<2x128xf32>
    %cst_17 = arith.constant 0.797884583 : f32
    %41 = vector.broadcast %cst_17 : f32 to vector<2x128xf32>
    %42 = arith.mulf %41, %40 : vector<2x128xf32>
    %43 = math.tanh %42 : vector<2x128xf32>
    %cst_18 = arith.constant 1.000000e+00 : f32
    %44 = vector.broadcast %cst_18 : f32 to vector<2x128xf32>
    %45 = arith.addf %44, %43 : vector<2x128xf32>
    %46 = arith.mulf %35, %45 : vector<2x128xf32>
    %47 = arith.truncf %27 : vector<2x128xf32> to vector<2x128xbf16>
    %c0_19 = arith.constant 0 : index
    %c0_20 = arith.constant 0 : index
    %48 = vector.load %arg6[%c0_19, %c0_20] : memref<128x128xbf16, #tpu.memory_space<vmem>>, vector<128x128xbf16>
    %cst_21 = arith.constant dense<0.000000e+00> : vector<2x128xf32>
    %49 = tpu.matmul %47, %48, %cst_21 {dimension_numbers = #tpu.dot_dimension_numbers<[1], [0], [0], [1], [0, 0, 1, 1], [], []>} : vector<2x128xbf16>, vector<128x128xbf16>, vector<2x128xf32> -> vector<2x128xf32>
    %c0_22 = arith.constant 0 : index
    %c0_23 = arith.constant 0 : index
    %50 = vector.load %arg7[%c0_22, %c0_23] : memref<1x128xf32, #tpu.memory_space<vmem>>, vector<1x128xf32>
    %51 = vector.broadcast %50 : vector<1x128xf32> to vector<2x128xf32>
    %52 = arith.addf %49, %51 : vector<2x128xf32>
    %cst_24 = arith.constant 5.000000e-01 : f32
    %53 = vector.broadcast %cst_24 : f32 to vector<2x128xf32>
    %54 = arith.mulf %53, %52 : vector<2x128xf32>
    %cst_25 = arith.constant 4.471500e-02 : f32
    %55 = vector.broadcast %cst_25 : f32 to vector<2x128xf32>
    %56 = arith.mulf %55, %52 : vector<2x128xf32>
    %57 = arith.mulf %56, %52 : vector<2x128xf32>
    %58 = arith.mulf %57, %52 : vector<2x128xf32>
    %59 = arith.addf %52, %58 : vector<2x128xf32>
    %cst_26 = arith.constant 0.797884583 : f32
    %60 = vector.broadcast %cst_26 : f32 to vector<2x128xf32>
    %61 = arith.mulf %60, %59 : vector<2x128xf32>
    %62 = math.tanh %61 : vector<2x128xf32>
    %cst_27 = arith.constant 1.000000e+00 : f32
    %63 = vector.broadcast %cst_27 : f32 to vector<2x128xf32>
    %64 = arith.addf %63, %62 : vector<2x128xf32>
    %65 = arith.mulf %54, %64 : vector<2x128xf32>
    %66 = arith.truncf %46 : vector<2x128xf32> to vector<2x128xbf16>
    %c0_28 = arith.constant 0 : index
    %c0_29 = arith.constant 0 : index
    %67 = vector.load %arg8[%c0_28, %c0_29] : memref<128x128xbf16, #tpu.memory_space<vmem>>, vector<128x128xbf16>
    %cst_30 = arith.constant dense<0.000000e+00> : vector<2x128xf32>
    %68 = tpu.matmul %66, %67, %cst_30 {dimension_numbers = #tpu.dot_dimension_numbers<[1], [0], [0], [1], [0, 0, 1, 1], [], []>} : vector<2x128xbf16>, vector<128x128xbf16>, vector<2x128xf32> -> vector<2x128xf32>
    %69 = arith.truncf %65 : vector<2x128xf32> to vector<2x128xbf16>
    %c0_31 = arith.constant 0 : index
    %c0_32 = arith.constant 0 : index
    %70 = vector.load %arg9[%c0_31, %c0_32] : memref<128x128xbf16, #tpu.memory_space<vmem>>, vector<128x128xbf16>
    %cst_33 = arith.constant dense<0.000000e+00> : vector<2x128xf32>
    %71 = tpu.matmul %69, %70, %cst_33 {dimension_numbers = #tpu.dot_dimension_numbers<[1], [0], [0], [1], [0, 0, 1, 1], [], []>} : vector<2x128xbf16>, vector<128x128xbf16>, vector<2x128xf32> -> vector<2x128xf32>
    %72 = arith.addf %68, %71 : vector<2x128xf32>
    %c0_34 = arith.constant 0 : index
    %c0_35 = arith.constant 0 : index
    %73 = vector.load %arg10[%c0_34, %c0_35] : memref<1x128xf32, #tpu.memory_space<vmem>>, vector<1x128xf32>
    %74 = vector.broadcast %73 : vector<1x128xf32> to vector<2x128xf32>
    %75 = arith.addf %72, %74 : vector<2x128xf32>
    %cst_36 = arith.constant 5.000000e-01 : f32
    %76 = vector.broadcast %cst_36 : f32 to vector<2x128xf32>
    %77 = arith.mulf %76, %75 : vector<2x128xf32>
    %cst_37 = arith.constant 4.471500e-02 : f32
    %78 = vector.broadcast %cst_37 : f32 to vector<2x128xf32>
    %79 = arith.mulf %78, %75 : vector<2x128xf32>
    %80 = arith.mulf %79, %75 : vector<2x128xf32>
    %81 = arith.mulf %80, %75 : vector<2x128xf32>
    %82 = arith.addf %75, %81 : vector<2x128xf32>
    %cst_38 = arith.constant 0.797884583 : f32
    %83 = vector.broadcast %cst_38 : f32 to vector<2x128xf32>
    %84 = arith.mulf %83, %82 : vector<2x128xf32>
    %85 = math.tanh %84 : vector<2x128xf32>
    %cst_39 = arith.constant 1.000000e+00 : f32
    %86 = vector.broadcast %cst_39 : f32 to vector<2x128xf32>
    %87 = arith.addf %86, %85 : vector<2x128xf32>
    %88 = arith.mulf %77, %87 : vector<2x128xf32>
    %89 = arith.truncf %88 : vector<2x128xf32> to vector<2x128xbf16>
    %c0_40 = arith.constant 0 : index
    %c0_41 = arith.constant 0 : index
    %90 = vector.load %arg11[%c0_40, %c0_41] : memref<128x128xbf16, #tpu.memory_space<vmem>>, vector<128x128xbf16>
    %cst_42 = arith.constant dense<0.000000e+00> : vector<2x128xf32>
    %91 = tpu.matmul %89, %90, %cst_42 {dimension_numbers = #tpu.dot_dimension_numbers<[1], [0], [0], [1], [0, 0, 1, 1], [], []>} : vector<2x128xbf16>, vector<128x128xbf16>, vector<2x128xf32> -> vector<2x128xf32>
    %c0_43 = arith.constant 0 : index
    %c0_44 = arith.constant 0 : index
    %92 = vector.load %arg12[%c0_43, %c0_44] : memref<1x128xf32, #tpu.memory_space<vmem>>, vector<1x128xf32>
    %93 = vector.broadcast %92 : vector<1x128xf32> to vector<2x128xf32>
    %94 = arith.addf %91, %93 : vector<2x128xf32>
    %cst_45 = arith.constant dense<0xFF800000> : vector<2xf32>
    %95 = vector.multi_reduction <maximumf>, %94, %cst_45 [1] : vector<2x128xf32> to vector<2xf32>
    %96 = vector.shape_cast %95 : vector<2xf32> to vector<2x1xf32>
    %97 = vector.broadcast %96 : vector<2x1xf32> to vector<2x128xf32>
    %98 = arith.subf %94, %97 : vector<2x128xf32>
    %99 = math.exp %98 : vector<2x128xf32>
    %cst_46 = arith.constant dense<0.000000e+00> : vector<2xf32>
    %100 = vector.multi_reduction <add>, %99, %cst_46 [1] : vector<2x128xf32> to vector<2xf32>
    %101 = vector.shape_cast %100 : vector<2xf32> to vector<2x1xf32>
    %102 = math.log %101 : vector<2x1xf32>
    %103 = arith.addf %96, %102 : vector<2x1xf32>
    %104 = tpu.iota {dimensions = array<i32: 1>} : vector<2x128xi32>
    %c0_47 = arith.constant 0 : index
    %c0_48 = arith.constant 0 : index
    %105 = vector.load %arg3[%c0_47, %c0_48] : memref<2x1xi32, #tpu.memory_space<vmem>>, vector<2x1xi32>
    %106 = vector.broadcast %105 : vector<2x1xi32> to vector<2x128xi32>
    %107 = arith.cmpi eq, %104, %106 : vector<2x128xi32>
    %108 = arith.extui %107 : vector<2x128xi1> to vector<2x128xi32>
    %109 = arith.sitofp %108 : vector<2x128xi32> to vector<2x128xf32>
    %110 = arith.mulf %109, %94 : vector<2x128xf32>
    %cst_49 = arith.constant dense<0.000000e+00> : vector<2xf32>
    %111 = vector.multi_reduction <add>, %110, %cst_49 [1] : vector<2x128xf32> to vector<2xf32>
    %112 = vector.shape_cast %111 : vector<2xf32> to vector<2x1xf32>
    %113 = arith.subf %103, %112 : vector<2x1xf32>
    %c4_i32 = arith.constant 4 : i32
    %114 = vector.broadcast %c4_i32 : i32 to vector<2x128xi32>
    %115 = arith.cmpi eq, %104, %114 : vector<2x128xi32>
    %116 = vector.shape_cast %113 : vector<2x1xf32> to vector<2x1xf32>
    %117 = vector.broadcast %116 : vector<2x1xf32> to vector<2x128xf32>
    %118 = arith.select %115, %117, %94 : vector<2x128xi1>, vector<2x128xf32>
    %c0_50 = arith.constant 0 : index
    %c0_51 = arith.constant 0 : index
    %119 = vector.load %arg13[%c0_50, %c0_51] : memref<2x128xf32, #tpu.memory_space<vmem>>, vector<2x128xf32>
    tpu.vector_store %arg13[%c0_50, %c0_51], %118 {strides = array<i32>} : memref<2x128xf32, #tpu.memory_space<vmem>>, vector<2x128xf32>,
    return
  }
  func.func @transform_0(%arg0: i32) -> (i32, i32) {
    %c0_i32 = arith.constant 0 : i32
    %c0_i32_0 = arith.constant 0 : i32
    return %arg0, %c0_i32 : i32, i32
  }
  func.func @transform_1(%arg0: i32) -> (i32, i32) {
    %c0_i32 = arith.constant 0 : i32
    %c0_i32_0 = arith.constant 0 : i32
    return %arg0, %c0_i32 : i32, i32
  }
  func.func @transform_2(%arg0: i32) -> (i32, i32) {
    %c0_i32 = arith.constant 0 : i32
    %c0_i32_0 = arith.constant 0 : i32
    return %arg0, %c0_i32 : i32, i32
  }
  func.func @transform_3(%arg0: i32) -> (i32, i32) {
    %c0_i32 = arith.constant 0 : i32
    %c0_i32_0 = arith.constant 0 : i32
    %c0_i32_1 = arith.constant 0 : i32
    return %c0_i32, %c0_i32_0 : i32, i32
  }
  func.func @transform_4(%arg0: i32) -> (i32, i32) {
    %c0_i32 = arith.constant 0 : i32
    %c0_i32_0 = arith.constant 0 : i32
    %c0_i32_1 = arith.constant 0 : i32
    return %c0_i32, %c0_i32_0 : i32, i32
  }
  func.func @transform_5(%arg0: i32) -> (i32, i32) {
    %c0_i32 = arith.constant 0 : i32
    %c0_i32_0 = arith.constant 0 : i32
    %c0_i32_1 = arith.constant 0 : i32
    return %c0_i32, %c0_i32_0 : i32, i32
  }
  func.func @transform_6(%arg0: i32) -> (i32, i32) {
    %c0_i32 = arith.constant 0 : i32
    %c0_i32_0 = arith.constant 0 : i32
    %c0_i32_1 = arith.constant 0 : i32
    return %c0_i32, %c0_i32_0 : i32, i32
  }
  func.func @transform_7(%arg0: i32) -> (i32, i32) {
    %c0_i32 = arith.constant 0 : i32
    %c0_i32_0 = arith.constant 0 : i32
    %c0_i32_1 = arith.constant 0 : i32
    return %c0_i32, %c0_i32_0 : i32, i32
  }
  func.func @transform_8(%arg0: i32) -> (i32, i32) {
    %c0_i32 = arith.constant 0 : i32
    %c0_i32_0 = arith.constant 0 : i32
    %c0_i32_1 = arith.constant 0 : i32
    return %c0_i32, %c0_i32_0 : i32, i32
  }
  func.func @transform_9(%arg0: i32) -> (i32, i32) {
    %c0_i32 = arith.constant 0 : i32
    %c0_i32_0 = arith.constant 0 : i32
    %c0_i32_1 = arith.constant 0 : i32
    return %c0_i32, %c0_i32_0 : i32, i32
  }
  func.func @transform_10(%arg0: i32) -> (i32, i32) {
    %c0_i32 = arith.constant 0 : i32
    %c0_i32_0 = arith.constant 0 : i32
    %c0_i32_1 = arith.constant 0 : i32
    return %c0_i32, %c0_i32_0 : i32, i32
  }
  func.func @transform_11(%arg0: i32) -> (i32, i32) {
    %c0_i32 = arith.constant 0 : i32
    %c0_i32_0 = arith.constant 0 : i32
    %c0_i32_1 = arith.constant 0 : i32
    return %c0_i32, %c0_i32_0 : i32, i32
  }
  func.func @transform_12(%arg0: i32) -> (i32, i32) {
    %c0_i32 = arith.constant 0 : i32
    %c0_i32_0 = arith.constant 0 : i32
    return %arg0, %c0_i32 : i32, i32
  }
}

</mosaic_0001>

<llo_original>
// kernel: tpu_custom_call.1
$region0: #{tpu_custom_call.1}
  #allocation0 [shape = 'u32[]', space=smem, size = 0x4, offset = 0x4, fixed_abs, tag = 'smem constant byte address 0x4 - core index']
  #allocation1 [shape = 'u32[144,128]{1,0:T(1,128)}', space=vmem, size = 0x12000, scoped, tag = 'internal scratch']
  %s0 = inlined_call_operand.vmem [shape: f32[2,128], index: 0, kind: input, shape index: {}]
  %s1 = inlined_call_operand.vmem [shape: f32[2,128], index: 1, kind: input, shape index: {}]
  %s2 = inlined_call_operand.vmem [shape: s32[2,1], index: 2, kind: input, shape index: {}]
  %s3 = inlined_call_operand.hbm [shape: bf16[128,128], index: 3, kind: input, shape index: {}]
  %s4 = inlined_call_operand.vmem [shape: f32[1,128], index: 4, kind: input, shape index: {}]
  %s5 = inlined_call_operand.hbm [shape: bf16[128,128], index: 5, kind: input, shape index: {}]
  %s6 = inlined_call_operand.vmem [shape: f32[1,128], index: 6, kind: input, shape index: {}]
  %s7 = inlined_call_operand.hbm [shape: bf16[128,128], index: 7, kind: input, shape index: {}]
  %s8 = inlined_call_operand.hbm [shape: bf16[128,128], index: 8, kind: input, shape index: {}]
  %s9 = inlined_call_operand.vmem [shape: f32[1,128], index: 9, kind: input, shape index: {}]
  %s10 = inlined_call_operand.hbm [shape: bf16[128,128], index: 10, kind: input, shape index: {}]
  %s11 = inlined_call_operand.vmem [shape: f32[1,128], index: 11, kind: input, shape index: {}]
  %s12 = inlined_call_operand.hbm [shape: f32[2,128], index: 12, kind: output, shape index: {}]
  %s13 = sld [smem:[#allocation0]]
  $region78: #{tpu_custom_call.1} parent=0
    _
  %s15 = ssub.s32 1, %s13
  %s16 = scalar_select 0, %s15, %s13
  $region1: #{tpu_custom_call.1} parent=0
    #allocation2 [shape = 'u8[32768]{0}', space=vmem, size = 0x8000, scoped, tag = 'input window, operand 3, single buffered']
    #allocation3 [shape = 's32[1]{0}', space=sflag, size = 0x4, scoped, tag = 'scoped memory for tpu_custom_call.1']
    #allocation4 [shape = 's32[1]{0}', space=sflag, size = 0x4, scoped, tag = 'scoped memory for tpu_custom_call.1']
    #allocation5 [shape = 'u8[32768]{0}', space=vmem, size = 0x8000, scoped, tag = 'input window, operand 5, single buffered']
    #allocation6 [shape = 's32[1]{0}', space=sflag, size = 0x4, scoped, tag = 'scoped memory for tpu_custom_call.1']
    #allocation7 [shape = 'u8[32768]{0}', space=vmem, size = 0x8000, scoped, tag = 'input window, operand 7, single buffered']
    #allocation8 [shape = 'u8[32768]{0}', space=vmem, size = 0x8000, scoped, tag = 'input window, operand 8, single buffered']
    #allocation9 [shape = 's32[1]{0}', space=sflag, size = 0x4, scoped, tag = 'scoped memory for tpu_custom_call.1']
    #allocation10 [shape = 'u8[32768]{0}', space=vmem, size = 0x8000, scoped, tag = 'input window, operand 10, single buffered']
    #allocation11 [shape = 'u8[1024]{0}', space=vmem, size = 0x400, scoped, tag = 'output window, operand 0, single buffered']
    %17 = vsyncpa [#allocation3], 0
    %18 = vsyncpa [#allocation6], 0
    %19 = vsyncpa [#allocation9], 0
    %20 = vsyncpa [#allocation4], 0
    // Predicated region
    $region2: #{tpu_custom_call.1} parent=1 // pred_check
      _
    $region3: #{tpu_custom_call.1} parent=1 // pred_check_branch
      %22 = sbr.rel (0) target = $region5
    $region4: #{tpu_custom_call.1} parent=1 // pred_region
      _
    $region5: #{tpu_custom_call.1} parent=1 // pred_fallthru
      _
    // Predicated region
    $region6: #{tpu_custom_call.1} parent=1 // pred_check
      _
    $region7: #{tpu_custom_call.1} parent=1 // pred_check_branch
      %24 = sbr.rel (0) target = $region9
    $region8: #{tpu_custom_call.1} parent=1 // pred_region
      _
    $region9: #{tpu_custom_call.1} parent=1 // pred_fallthru
      _
    // Predicated region
    $region10: #{tpu_custom_call.1} parent=1 // pred_check
      _
    $region11: #{tpu_custom_call.1} parent=1 // pred_check_branch
      %26 = sbr.rel (0) target = $region13
    $region12: #{tpu_custom_call.1} parent=1 // pred_region
      _
    $region13: #{tpu_custom_call.1} parent=1 // pred_fallthru
      _
    // Predicated region
    $region14: #{tpu_custom_call.1} parent=1 // pred_check
      _
    $region15: #{tpu_custom_call.1} parent=1 // pred_check_branch
      %28 = sbr.rel (0) target = $region17
    $region16: #{tpu_custom_call.1} parent=1 // pred_region
      %s30 = ssub.s32 1024, 1024
      %31 = vsyncadd [#allocation3], %s30
      %s32 = sshll.u32 [#allocation2], 4
      %s33 = int_to_ptr.vmem [resolvable:$true] %s32
      %38 = dma.hbm_to_vmem [thread:$0]  %s3, 1024, %s33, [#allocation3], 64, 64, 4
    $region17: #{tpu_custom_call.1} parent=1 // pred_fallthru
      _
    // Predicated region
    $region18: #{tpu_custom_call.1} parent=1 // pred_check
      _
    $region19: #{tpu_custom_call.1} parent=1 // pred_check_branch
      %40 = sbr.rel (0) target = $region21
    $region20: #{tpu_custom_call.1} parent=1 // pred_region
      _
    $region21: #{tpu_custom_call.1} parent=1 // pred_fallthru
      _
    // Predicated region
    $region22: #{tpu_custom_call.1} parent=1 // pred_check
      _
    $region23: #{tpu_custom_call.1} parent=1 // pred_check_branch
      %42 = sbr.rel (0) target = $region25
    $region24: #{tpu_custom_call.1} parent=1 // pred_region
      %s44 = ssub.s32 1024, 1024
      %45 = vsyncadd [#allocation6], %s44
      %s46 = sshll.u32 [#allocation5], 4
      %s47 = int_to_ptr.vmem [resolvable:$true] %s46
      %52 = dma.hbm_to_vmem [thread:$0]  %s5, 1024, %s47, [#allocation6], 64, 64, 4
    $region25: #{tpu_custom_call.1} parent=1 // pred_fallthru
      _
    // Predicated region
    $region26: #{tpu_custom_call.1} parent=1 // pred_check
      _
    $region27: #{tpu_custom_call.1} parent=1 // pred_check_branch
      %54 = sbr.rel (0) target = $region29
    $region28: #{tpu_custom_call.1} parent=1 // pred_region
      _
    $region29: #{tpu_custom_call.1} parent=1 // pred_fallthru
      _
    // Predicated region
    $region30: #{tpu_custom_call.1} parent=1 // pred_check
      _
    $region31: #{tpu_custom_call.1} parent=1 // pred_check_branch
      %56 = sbr.rel (0) target = $region33
    $region32: #{tpu_custom_call.1} parent=1 // pred_region
      %s58 = ssub.s32 1024, 1024
      %59 = vsyncadd [#allocation6], %s58
      %s60 = sshll.u32 [#allocation7], 4
      %s61 = int_to_ptr.vmem [resolvable:$true] %s60
      %66 = dma.hbm_to_vmem [thread:$0]  %s7, 1024, %s61, [#allocation6], 64, 64, 4
    $region33: #{tpu_custom_call.1} parent=1 // pred_fallthru
      _
    // Predicated region
    $region34: #{tpu_custom_call.1} parent=1 // pred_check
      _
    $region35: #{tpu_custom_call.1} parent=1 // pred_check_branch
      %68 = sbr.rel (0) target = $region37
    $region36: #{tpu_custom_call.1} parent=1 // pred_region
      %s70 = ssub.s32 1024, 1024
      %71 = vsyncadd [#allocation9], %s70
      %s72 = sshll.u32 [#allocation8], 4
      %s73 = int_to_ptr.vmem [resolvable:$true] %s72
      %78 = dma.hbm_to_vmem [thread:$0]  %s8, 1024, %s73, [#allocation9], 64, 64, 4
    $region37: #{tpu_custom_call.1} parent=1 // pred_fallthru
      _
    // Predicated region
    $region38: #{tpu_custom_call.1} parent=1 // pred_check
      _
    $region39: #{tpu_custom_call.1} parent=1 // pred_check_branch
      %80 = sbr.rel (0) target = $region41
    $region40: #{tpu_custom_call.1} parent=1 // pred_region
      _
    $region41: #{tpu_custom_call.1} parent=1 // pred_fallthru
      _
    // Predicated region
    $region42: #{tpu_custom_call.1} parent=1 // pred_check
      _
    $region43: #{tpu_custom_call.1} parent=1 // pred_check_branch
      %82 = sbr.rel (0) target = $region45
    $region44: #{tpu_custom_call.1} parent=1 // pred_region
      %s84 = ssub.s32 1024, 1024
      %85 = vsyncadd [#allocation9], %s84
      %s86 = sshll.u32 [#allocation10], 4
      %s87 = int_to_ptr.vmem [resolvable:$true] %s86
      %92 = dma.hbm_to_vmem [thread:$0]  %s10, 1024, %s87, [#allocation9], 64, 64, 4
    $region45: #{tpu_custom_call.1} parent=1 // pred_fallthru
      _
    // Predicated region
    $region46: #{tpu_custom_call.1} parent=1 // pred_check
      _
    $region47: #{tpu_custom_call.1} parent=1 // pred_check_branch
      %94 = sbr.rel (0) target = $region49
    $region48: #{tpu_custom_call.1} parent=1 // pred_region
      _
    $region49: #{tpu_custom_call.1} parent=1 // pred_fallthru
      _
    // Predicated region
    $region50: #{tpu_custom_call.1} parent=1 // pred_check
      _
    $region51: #{tpu_custom_call.1} parent=1 // pred_check_branch
      %96 = sbr.rel (0) target = $region53
    $region52: #{tpu_custom_call.1} parent=1 // pred_region
      %97 = dma.done [#allocation3], 1024
    $region53: #{tpu_custom_call.1} parent=1 // pred_fallthru
      _
    // Predicated region
    $region54: #{tpu_custom_call.1} parent=1 // pred_check
      _
    $region55: #{tpu_custom_call.1} parent=1 // pred_check_branch
      %99 = sbr.rel (0) target = $region57
    $region56: #{tpu_custom_call.1} parent=1 // pred_region
      %100 = dma.done [#allocation6], 1024
    $region57: #{tpu_custom_call.1} parent=1 // pred_fallthru
      _
    // Predicated region
    $region58: #{tpu_custom_call.1} parent=1 // pred_check
      _
    $region59: #{tpu_custom_call.1} parent=1 // pred_check_branch
      %102 = sbr.rel (0) target = $region61
    $region60: #{tpu_custom_call.1} parent=1 // pred_region
      %103 = dma.done [#allocation6], 1024
    $region61: #{tpu_custom_call.1} parent=1 // pred_fallthru
      _
    // Predicated region
    $region62: #{tpu_custom_call.1} parent=1 // pred_check
      _
    $region63: #{tpu_custom_call.1} parent=1 // pred_check_branch
      %105 = sbr.rel (0) target = $region65
    $region64: #{tpu_custom_call.1} parent=1 // pred_region
      %106 = dma.done [#allocation9], 1024
    $region65: #{tpu_custom_call.1} parent=1 // pred_fallthru
      _
    // Predicated region
    $region66: #{tpu_custom_call.1} parent=1 // pred_check
      _
    $region67: #{tpu_custom_call.1} parent=1 // pred_check_branch
      %108 = sbr.rel (0) target = $region69
    $region68: #{tpu_custom_call.1} parent=1 // pred_region
      %109 = dma.done [#allocation9], 1024
    $region69: #{tpu_custom_call.1} parent=1 // pred_fallthru
      _
    %v111 = vld [vmem:[%s0] sm:$0x3]
    %v112 = vmul.f32 %v111, 0.5
    %v113 = vmul.f32 %v111, 0.044715
    %v114 = vmul.f32 %v113, %v111
    %v115 = vmul.f32 %v114, %v111
    %v116 = vadd.f32 %v111, %v115
    %v117 = vmul.f32 %v116, 0.7978846
    %v118 = vtanh.pop %v117
    %v119 = vadd.f32 %v118, 1.0
    %v120 = vmul.f32 %v112, %v119
    %v121 = vld [vmem:[%s1] sm:$0x3]
    %v122 = vmul.f32 %v121, 0.5
    %v123 = vmul.f32 %v121, 0.044715
    %v124 = vmul.f32 %v123, %v121
    %v125 = vmul.f32 %v124, %v121
    %v126 = vadd.f32 %v121, %v125
    %v127 = vmul.f32 %v126, 0.7978846
    %v128 = vtanh.pop %v127
    %v129 = vadd.f32 %v128, 1.0
    %v130 = vmul.f32 %v122, %v129
    %v131 = vpack.c.bf16 %v120, %v120
    %v132 = vld [vmem:[#allocation2] sm:$0xf]
    %v133 = vld [vmem:[#allocation2 + $0x4] sm:$0xf]
    %v134 = vld [vmem:[#allocation2 + $0x8] sm:$0xf]
    %v135 = vld [vmem:[#allocation2 + $0xc] sm:$0xf]
    %v136 = vld [vmem:[#allocation2 + $0x10] sm:$0xf]
    %v137 = vld [vmem:[#allocation2 + $0x14] sm:$0xf]
    %v138 = vld [vmem:[#allocation2 + $0x18] sm:$0xf]
    %v139 = vld [vmem:[#allocation2 + $0x1c] sm:$0xf]
    %v140 = vld [vmem:[#allocation2 + $0x20] sm:$0xf]
    %v141 = vld [vmem:[#allocation2 + $0x24] sm:$0xf]
    %v142 = vld [vmem:[#allocation2 + $0x28] sm:$0xf]
    %v143 = vld [vmem:[#allocation2 + $0x2c] sm:$0xf]
    %v144 = vld [vmem:[#allocation2 + $0x30] sm:$0xf]
    %v145 = vld [vmem:[#allocation2 + $0x34] sm:$0xf]
    %v146 = vld [vmem:[#allocation2 + $0x38] sm:$0xf]
    %v147 = vld [vmem:[#allocation2 + $0x3c] sm:$0xf]
    %v148 = vld [vmem:[%s4] sm:$0x1]
    %v150 = vlaneseq
    %v151 = vshrl.u32 %v150, 7
    %v152 = vsub.s32 0, %v151
    %v153 = vrot.slane %v148, %v152
    %v171 = vunpack.c.l.b16 %v132
    %v172 = vunpack.c.l.b16 %v133
    %v173 = vunpack.c.l.b16 %v134
    %v174 = vunpack.c.l.b16 %v135
    %v175 = vunpack.c.l.b16 %v136
    %v176 = vunpack.c.l.b16 %v137
    %v177 = vunpack.c.l.b16 %v138
    %v178 = vunpack.c.l.b16 %v139
    %v179 = vunpack.c.l.b16 %v140
    %v180 = vunpack.c.l.b16 %v141
    %v181 = vunpack.c.l.b16 %v142
    %v182 = vunpack.c.l.b16 %v143
    %v183 = vunpack.c.l.b16 %v144
    %v184 = vunpack.c.l.b16 %v145
    %v185 = vunpack.c.l.b16 %v146
    %v186 = vunpack.c.l.b16 %v147
    %v187 = vpack.c.b16 %v172, %v171
    %v188 = vpack.c.b16 %v174, %v173
    %v189 = vpack.c.b16 %v176, %v175
    %v190 = vpack.c.b16 %v178, %v177
    %v191 = vpack.c.b16 %v180, %v179
    %v192 = vpack.c.b16 %v182, %v181
    %v193 = vpack.c.b16 %v184, %v183
    %v194 = vpack.c.b16 %v186, %v185
    %203 = vmatprep.subr.bf16.mxu0 0
    %204 = vmatpush1.bf16.msra.mxu0 %v187
    %205 = vmatprep.subr.bf16.mxu0 0
    %206 = vmatpush1.bf16.msra.mxu0 %v188
    %207 = vmatprep.subr.bf16.mxu0 0
    %208 = vmatpush1.bf16.msra.mxu0 %v189
    %209 = vmatprep.subr.bf16.mxu0 0
    %210 = vmatpush1.bf16.msra.mxu0 %v190
    %211 = vmatprep.subr.bf16.mxu0 0
    %212 = vmatpush1.bf16.msra.mxu0 %v191
    %213 = vmatprep.subr.bf16.mxu0 0
    %214 = vmatpush1.bf16.msra.mxu0 %v192
    %215 = vmatprep.subr.bf16.mxu0 0
    %216 = vmatpush1.bf16.msra.mxu0 %v193
    %217 = vmatprep.subr.bf16.mxu0 0
    %218 = vmatpush1.bf16.msra.mxu0 %v194
    %219 = vmatprep.subr.bf16.mxu0 0
    %220 = vmatpush1.bf16.msra.mxu0 0
    %221 = vmatprep.subr.bf16.mxu0 0
    %222 = vmatpush1.bf16.msra.mxu0 0
    %223 = vmatprep.subr.bf16.mxu0 0
    %224 = vmatpush1.bf16.msra.mxu0 0
    %225 = vmatprep.subr.bf16.mxu0 0
    %226 = vmatpush1.bf16.msra.mxu0 0
    %227 = vmatprep.subr.bf16.mxu0 0
    %228 = vmatpush1.bf16.msra.mxu0 0
    %229 = vmatprep.subr.bf16.mxu0 0
    %230 = vmatpush1.bf16.msra.mxu0 0
    %231 = vmatprep.subr.bf16.mxu0 0
    %232 = vmatpush1.bf16.msra.mxu0 0
    %233 = vmatprep.subr.bf16.mxu0 0
    %234 = vmatpush1.bf16.msra.mxu0 0
    %235 = vmatprep.mubr.bf16.mxu0 0
    %236 = vmatmul.mubr.bf16.gmra.mrb[0].mxu0 %v131
    %v237 = vpop.f32.mrb[0].mxu0
    %v238 = vadd.f32 %v153, %v237
    %v239 = vpop.f32.mrb[0].mxu0
    %v240 = vpop.f32.mrb[0].mxu0
    %v241 = vpop.f32.mrb[0].mxu0
    %242 = vdwg.mxu0
    %v243 = vmul.f32 %v238, 0.5
    %v244 = vmul.f32 %v238, 0.044715
    %v245 = vmul.f32 %v244, %v238
    %v246 = vmul.f32 %v245, %v238
    %v247 = vadd.f32 %v238, %v246
    %v248 = vmul.f32 %v247, 0.7978846
    %v249 = vtanh.pop %v248
    %v250 = vadd.f32 %v249, 1.0
    %v251 = vmul.f32 %v243, %v250
    %v252 = vpack.c.bf16 %v130, %v130
    %v253 = vld [vmem:[#allocation5] sm:$0xf]
    %v254 = vld [vmem:[#allocation5 + $0x4] sm:$0xf]
    %v255 = vld [vmem:[#allocation5 + $0x8] sm:$0xf]
    %v256 = vld [vmem:[#allocation5 + $0xc] sm:$0xf]
    %v257 = vld [vmem:[#allocation5 + $0x10] sm:$0xf]
    %v258 = vld [vmem:[#allocation5 + $0x14] sm:$0xf]
    %v259 = vld [vmem:[#allocation5 + $0x18] sm:$0xf]
    %v260 = vld [vmem:[#allocation5 + $0x1c] sm:$0xf]
    %v261 = vld [vmem:[#allocation5 + $0x20] sm:$0xf]
    %v262 = vld [vmem:[#allocation5 + $0x24] sm:$0xf]
    %v263 = vld [vmem:[#allocation5 + $0x28] sm:$0xf]
    %v264 = vld [vmem:[#allocation5 + $0x2c] sm:$0xf]
    %v265 = vld [vmem:[#allocation5 + $0x30] sm:$0xf]
    %v266 = vld [vmem:[#allocation5 + $0x34] sm:$0xf]
    %v267 = vld [vmem:[#allocation5 + $0x38] sm:$0xf]
    %v268 = vld [vmem:[#allocation5 + $0x3c] sm:$0xf]
    %v269 = vld [vmem:[%s6] sm:$0x1]
    %v271 = vlaneseq
    %v272 = vshrl.u32 %v271, 7
    %v273 = vsub.s32 0, %v272
    %v274 = vrot.slane %v269, %v273
    %v292 = vunpack.c.l.b16 %v253
    %v293 = vunpack.c.l.b16 %v254
    %v294 = vunpack.c.l.b16 %v255
    %v295 = vunpack.c.l.b16 %v256
    %v296 = vunpack.c.l.b16 %v257
    %v297 = vunpack.c.l.b16 %v258
    %v298 = vunpack.c.l.b16 %v259
    %v299 = vunpack.c.l.b16 %v260
    %v300 = vunpack.c.l.b16 %v261
    %v301 = vunpack.c.l.b16 %v262
    %v302 = vunpack.c.l.b16 %v263
    %v303 = vunpack.c.l.b16 %v264
    %v304 = vunpack.c.l.b16 %v265
    %v305 = vunpack.c.l.b16 %v266
    %v306 = vunpack.c.l.b16 %v267
    %v307 = vunpack.c.l.b16 %v268
    %v308 = vpack.c.b16 %v293, %v292
    %v309 = vpack.c.b16 %v295, %v294
    %v310 = vpack.c.b16 %v297, %v296
    %v311 = vpack.c.b16 %v299, %v298
    %v312 = vpack.c.b16 %v301, %v300
    %v313 = vpack.c.b16 %v303, %v302
    %v314 = vpack.c.b16 %v305, %v304
    %v315 = vpack.c.b16 %v307, %v306
    %324 = vmatprep.subr.bf16.mxu0 0
    %325 = vmatpush1.bf16.msra.mxu0 %v308
    %326 = vmatprep.subr.bf16.mxu0 0
    %327 = vmatpush1.bf16.msra.mxu0 %v309
    %328 = vmatprep.subr.bf16.mxu0 0
    %329 = vmatpush1.bf16.msra.mxu0 %v310
    %330 = vmatprep.subr.bf16.mxu0 0
    %331 = vmatpush1.bf16.msra.mxu0 %v311
    %332 = vmatprep.subr.bf16.mxu0 0
    %333 = vmatpush1.bf16.msra.mxu0 %v312
    %334 = vmatprep.subr.bf16.mxu0 0
    %335 = vmatpush1.bf16.msra.mxu0 %v313
    %336 = vmatprep.subr.bf16.mxu0 0
    %337 = vmatpush1.bf16.msra.mxu0 %v314
    %338 = vmatprep.subr.bf16.mxu0 0
    %339 = vmatpush1.bf16.msra.mxu0 %v315
    %340 = vmatprep.subr.bf16.mxu0 0
    %341 = vmatpush1.bf16.msra.mxu0 0
    %342 = vmatprep.subr.bf16.mxu0 0
    %343 = vmatpush1.bf16.msra.mxu0 0
    %344 = vmatprep.subr.bf16.mxu0 0
    %345 = vmatpush1.bf16.msra.mxu0 0
    %346 = vmatprep.subr.bf16.mxu0 0
    %347 = vmatpush1.bf16.msra.mxu0 0
    %348 = vmatprep.subr.bf16.mxu0 0
    %349 = vmatpush1.bf16.msra.mxu0 0
    %350 = vmatprep.subr.bf16.mxu0 0
    %351 = vmatpush1.bf16.msra.mxu0 0
    %352 = vmatprep.subr.bf16.mxu0 0
    %353 = vmatpush1.bf16.msra.mxu0 0
    %354 = vmatprep.subr.bf16.mxu0 0
    %355 = vmatpush1.bf16.msra.mxu0 0
    %356 = vmatprep.mubr.bf16.mxu0 0
    %357 = vmatmul.mubr.bf16.gmra.mrb[0].mxu0 %v252
    %v358 = vpop.f32.mrb[0].mxu0
    %v359 = vadd.f32 %v274, %v358
    %v360 = vpop.f32.mrb[0].mxu0
    %v361 = vpop.f32.mrb[0].mxu0
    %v362 = vpop.f32.mrb[0].mxu0
    %363 = vdwg.mxu0
    %v364 = vmul.f32 %v359, 0.5
    %v365 = vmul.f32 %v359, 0.044715
    %v366 = vmul.f32 %v365, %v359
    %v367 = vmul.f32 %v366, %v359
    %v368 = vadd.f32 %v359, %v367
    %v369 = vmul.f32 %v368, 0.7978846
    %v370 = vtanh.pop %v369
    %v371 = vadd.f32 %v370, 1.0
    %v372 = vmul.f32 %v364, %v371
    %v373 = vpack.c.bf16 %v251, %v251
    %v374 = vld [vmem:[#allocation7] sm:$0xf]
    %v375 = vld [vmem:[#allocation7 + $0x4] sm:$0xf]
    %v376 = vld [vmem:[#allocation7 + $0x8] sm:$0xf]
    %v377 = vld [vmem:[#allocation7 + $0xc] sm:$0xf]
    %v378 = vld [vmem:[#allocation7 + $0x10] sm:$0xf]
    %v379 = vld [vmem:[#allocation7 + $0x14] sm:$0xf]
    %v380 = vld [vmem:[#allocation7 + $0x18] sm:$0xf]
    %v381 = vld [vmem:[#allocation7 + $0x1c] sm:$0xf]
    %v382 = vld [vmem:[#allocation7 + $0x20] sm:$0xf]
    %v383 = vld [vmem:[#allocation7 + $0x24] sm:$0xf]
    %v384 = vld [vmem:[#allocation7 + $0x28] sm:$0xf]
    %v385 = vld [vmem:[#allocation7 + $0x2c] sm:$0xf]
    %v386 = vld [vmem:[#allocation7 + $0x30] sm:$0xf]
    %v387 = vld [vmem:[#allocation7 + $0x34] sm:$0xf]
    %v388 = vld [vmem:[#allocation7 + $0x38] sm:$0xf]
    %v389 = vld [vmem:[#allocation7 + $0x3c] sm:$0xf]
    %v390 = vpack.c.bf16 %v372, %v372
    %v391 = vld [vmem:[#allocation8] sm:$0xf]
    %v392 = vld [vmem:[#allocation8 + $0x4] sm:$0xf]
    %v393 = vld [vmem:[#allocation8 + $0x8] sm:$0xf]
    %v394 = vld [vmem:[#allocation8 + $0xc] sm:$0xf]
    %v395 = vld [vmem:[#allocation8 + $0x10] sm:$0xf]
    %v396 = vld [vmem:[#allocation8 + $0x14] sm:$0xf]
    %v397 = vld [vmem:[#allocation8 + $0x18] sm:$0xf]
    %v398 = vld [vmem:[#allocation8 + $0x1c] sm:$0xf]
    %v399 = vld [vmem:[#allocation8 + $0x20] sm:$0xf]
    %v400 = vld [vmem:[#allocation8 + $0x24] sm:$0xf]
    %v401 = vld [vmem:[#allocation8 + $0x28] sm:$0xf]
    %v402 = vld [vmem:[#allocation8 + $0x2c] sm:$0xf]
    %v403 = vld [vmem:[#allocation8 + $0x30] sm:$0xf]
    %v404 = vld [vmem:[#allocation8 + $0x34] sm:$0xf]
    %v405 = vld [vmem:[#allocation8 + $0x38] sm:$0xf]
    %v406 = vld [vmem:[#allocation8 + $0x3c] sm:$0xf]
    %v423 = vunpack.c.l.b16 %v391
    %v424 = vunpack.c.l.b16 %v392
    %v425 = vunpack.c.l.b16 %v393
    %v426 = vunpack.c.l.b16 %v394
    %v427 = vunpack.c.l.b16 %v395
    %v428 = vunpack.c.l.b16 %v396
    %v429 = vunpack.c.l.b16 %v397
    %v430 = vunpack.c.l.b16 %v398
    %v431 = vunpack.c.l.b16 %v399
    %v432 = vunpack.c.l.b16 %v400
    %v433 = vunpack.c.l.b16 %v401
    %v434 = vunpack.c.l.b16 %v402
    %v435 = vunpack.c.l.b16 %v403
    %v436 = vunpack.c.l.b16 %v404
    %v437 = vunpack.c.l.b16 %v405
    %v438 = vunpack.c.l.b16 %v406
    %v439 = vpack.c.b16 %v424, %v423
    %v440 = vpack.c.b16 %v426, %v425
    %v441 = vpack.c.b16 %v428, %v427
    %v442 = vpack.c.b16 %v430, %v429
    %v443 = vpack.c.b16 %v432, %v431
    %v444 = vpack.c.b16 %v434, %v433
    %v445 = vpack.c.b16 %v436, %v435
    %v446 = vpack.c.b16 %v438, %v437
    %455 = vmatprep.subr.bf16.mxu0 0
    %456 = vmatpush1.bf16.msra.mxu0 %v439
    %457 = vmatprep.subr.bf16.mxu0 0
    %458 = vmatpush1.bf16.msra.mxu0 %v440
    %459 = vmatprep.subr.bf16.mxu0 0
    %460 = vmatpush1.bf16.msra.mxu0 %v441
    %461 = vmatprep.subr.bf16.mxu0 0
    %462 = vmatpush1.bf16.msra.mxu0 %v442
    %463 = vmatprep.subr.bf16.mxu0 0
    %464 = vmatpush1.bf16.msra.mxu0 %v443
    %465 = vmatprep.subr.bf16.mxu0 0
    %466 = vmatpush1.bf16.msra.mxu0 %v444
    %467 = vmatprep.subr.bf16.mxu0 0
    %468 = vmatpush1.bf16.msra.mxu0 %v445
    %469 = vmatprep.subr.bf16.mxu0 0
    %470 = vmatpush1.bf16.msra.mxu0 %v446
    %471 = vmatprep.subr.bf16.mxu0 0
    %472 = vmatpush1.bf16.msra.mxu0 0
    %473 = vmatprep.subr.bf16.mxu0 0
    %474 = vmatpush1.bf16.msra.mxu0 0
    %475 = vmatprep.subr.bf16.mxu0 0
    %476 = vmatpush1.bf16.msra.mxu0 0
    %477 = vmatprep.subr.bf16.mxu0 0
    %478 = vmatpush1.bf16.msra.mxu0 0
    %479 = vmatprep.subr.bf16.mxu0 0
    %480 = vmatpush1.bf16.msra.mxu0 0
    %481 = vmatprep.subr.bf16.mxu0 0
    %482 = vmatpush1.bf16.msra.mxu0 0
    %483 = vmatprep.subr.bf16.mxu0 0
    %484 = vmatpush1.bf16.msra.mxu0 0
    %485 = vmatprep.subr.bf16.mxu0 0
    %486 = vmatpush1.bf16.msra.mxu0 0
    %487 = vmatprep.mubr.bf16.mxu0 0
    %488 = vmatmul.mubr.bf16.gmra.mrb[0].mxu0 %v390
    %v489 = vpop.f32.mrb[0].mxu0
    %v490 = vadd.f32 0.0, %v489
    %v491 = vpop.f32.mrb[0].mxu0
    %v492 = vpop.f32.mrb[0].mxu0
    %v493 = vpop.f32.mrb[0].mxu0
    %494 = vdwg.mxu0
    %v511 = vunpack.c.l.b16 %v374
    %v512 = vunpack.c.l.b16 %v375
    %v513 = vunpack.c.l.b16 %v376
    %v514 = vunpack.c.l.b16 %v377
    %v515 = vunpack.c.l.b16 %v378
    %v516 = vunpack.c.l.b16 %v379
    %v517 = vunpack.c.l.b16 %v380
    %v518 = vunpack.c.l.b16 %v381
    %v519 = vunpack.c.l.b16 %v382
    %v520 = vunpack.c.l.b16 %v383
    %v521 = vunpack.c.l.b16 %v384
    %v522 = vunpack.c.l.b16 %v385
    %v523 = vunpack.c.l.b16 %v386
    %v524 = vunpack.c.l.b16 %v387
    %v525 = vunpack.c.l.b16 %v388
    %v526 = vunpack.c.l.b16 %v389
    %v527 = vpack.c.b16 %v512, %v511
    %v528 = vpack.c.b16 %v514, %v513
    %v529 = vpack.c.b16 %v516, %v515
    %v530 = vpack.c.b16 %v518, %v517
    %v531 = vpack.c.b16 %v520, %v519
    %v532 = vpack.c.b16 %v522, %v521
    %v533 = vpack.c.b16 %v524, %v523
    %v534 = vpack.c.b16 %v526, %v525
    %543 = vmatprep.subr.bf16.mxu0 0
    %544 = vmatpush1.bf16.msra.mxu0 %v527
    %545 = vmatprep.subr.bf16.mxu0 0
    %546 = vmatpush1.bf16.msra.mxu0 %v528
    %547 = vmatprep.subr.bf16.mxu0 0
    %548 = vmatpush1.bf16.msra.mxu0 %v529
    %549 = vmatprep.subr.bf16.mxu0 0
    %550 = vmatpush1.bf16.msra.mxu0 %v530
    %551 = vmatprep.subr.bf16.mxu0 0
    %552 = vmatpush1.bf16.msra.mxu0 %v531
    %553 = vmatprep.subr.bf16.mxu0 0
    %554 = vmatpush1.bf16.msra.mxu0 %v532
    %555 = vmatprep.subr.bf16.mxu0 0
    %556 = vmatpush1.bf16.msra.mxu0 %v533
    %557 = vmatprep.subr.bf16.mxu0 0
    %558 = vmatpush1.bf16.msra.mxu0 %v534
    %559 = vmatprep.subr.bf16.mxu0 0
    %560 = vmatpush1.bf16.msra.mxu0 0
    %561 = vmatprep.subr.bf16.mxu0 0
    %562 = vmatpush1.bf16.msra.mxu0 0
    %563 = vmatprep.subr.bf16.mxu0 0
    %564 = vmatpush1.bf16.msra.mxu0 0
    %565 = vmatprep.subr.bf16.mxu0 0
    %566 = vmatpush1.bf16.msra.mxu0 0
    %567 = vmatprep.subr.bf16.mxu0 0
    %568 = vmatpush1.bf16.msra.mxu0 0
    %569 = vmatprep.subr.bf16.mxu0 0
    %570 = vmatpush1.bf16.msra.mxu0 0
    %571 = vmatprep.subr.bf16.mxu0 0
    %572 = vmatpush1.bf16.msra.mxu0 0
    %573 = vmatprep.subr.bf16.mxu0 0
    %574 = vmatpush1.bf16.msra.mxu0 0
    %575 = vmatprep.mubr.bf16.mxu0 0
    %576 = vmatmul.mubr.bf16.gmra.mrb[0].mxu0 %v373
    %v577 = vpop.f32.mrb[0].mxu0
    %v578 = vadd.f32 %v490, %v577
    %v579 = vpop.f32.mrb[0].mxu0
    %v580 = vpop.f32.mrb[0].mxu0
    %v581 = vpop.f32.mrb[0].mxu0
    %582 = vdwg.mxu0
    %v583 = vld [vmem:[%s9] sm:$0x1]
    %v585 = vlaneseq
    %v586 = vshrl.u32 %v585, 7
    %v587 = vsub.s32 0, %v586
    %v588 = vrot.slane %v583, %v587
    %v590 = vadd.f32 %v578, %v588
    %v591 = vmul.f32 %v590, 0.5
    %v592 = vmul.f32 %v590, 0.044715
    %v593 = vmul.f32 %v592, %v590
    %v594 = vmul.f32 %v593, %v590
    %v595 = vadd.f32 %v590, %v594
    %v596 = vmul.f32 %v595, 0.7978846
    %v597 = vtanh.pop %v596
    %v598 = vadd.f32 %v597, 1.0
    %v599 = vmul.f32 %v591, %v598
    %v600 = vpack.c.bf16 %v599, %v599
    %v601 = vld [vmem:[#allocation10] sm:$0xf]
    %v602 = vld [vmem:[#allocation10 + $0x4] sm:$0xf]
    %v603 = vld [vmem:[#allocation10 + $0x8] sm:$0xf]
    %v604 = vld [vmem:[#allocation10 + $0xc] sm:$0xf]
    %v605 = vld [vmem:[#allocation10 + $0x10] sm:$0xf]
    %v606 = vld [vmem:[#allocation10 + $0x14] sm:$0xf]
    %v607 = vld [vmem:[#allocation10 + $0x18] sm:$0xf]
    %v608 = vld [vmem:[#allocation10 + $0x1c] sm:$0xf]
    %v609 = vld [vmem:[#allocation10 + $0x20] sm:$0xf]
    %v610 = vld [vmem:[#allocation10 + $0x24] sm:$0xf]
    %v611 = vld [vmem:[#allocation10 + $0x28] sm:$0xf]
    %v612 = vld [vmem:[#allocation10 + $0x2c] sm:$0xf]
    %v613 = vld [vmem:[#allocation10 + $0x30] sm:$0xf]
    %v614 = vld [vmem:[#allocation10 + $0x34] sm:$0xf]
    %v615 = vld [vmem:[#allocation10 + $0x38] sm:$0xf]
    %v616 = vld [vmem:[#allocation10 + $0x3c] sm:$0xf]
    %v617 = vld [vmem:[%s11] sm:$0x1]
    %v619 = vlaneseq
    %v620 = vshrl.u32 %v619, 7
    %v621 = vsub.s32 0, %v620
    %v622 = vrot.slane %v617, %v621
    %v640 = vunpack.c.l.b16 %v601
    %v641 = vunpack.c.l.b16 %v602
    %v642 = vunpack.c.l.b16 %v603
    %v643 = vunpack.c.l.b16 %v604
    %v644 = vunpack.c.l.b16 %v605
    %v645 = vunpack.c.l.b16 %v606
    %v646 = vunpack.c.l.b16 %v607
    %v647 = vunpack.c.l.b16 %v608
    %v648 = vunpack.c.l.b16 %v609
    %v649 = vunpack.c.l.b16 %v610
    %v650 = vunpack.c.l.b16 %v611
    %v651 = vunpack.c.l.b16 %v612
    %v652 = vunpack.c.l.b16 %v613
    %v653 = vunpack.c.l.b16 %v614
    %v654 = vunpack.c.l.b16 %v615
    %v655 = vunpack.c.l.b16 %v616
    %v656 = vpack.c.b16 %v641, %v640
    %v657 = vpack.c.b16 %v643, %v642
    %v658 = vpack.c.b16 %v645, %v644
    %v659 = vpack.c.b16 %v647, %v646
    %v660 = vpack.c.b16 %v649, %v648
    %v661 = vpack.c.b16 %v651, %v650
    %v662 = vpack.c.b16 %v653, %v652
    %v663 = vpack.c.b16 %v655, %v654
    %672 = vmatprep.subr.bf16.mxu0 0
    %673 = vmatpush1.bf16.msra.mxu0 %v656
    %674 = vmatprep.subr.bf16.mxu0 0
    %675 = vmatpush1.bf16.msra.mxu0 %v657
    %676 = vmatprep.subr.bf16.mxu0 0
    %677 = vmatpush1.bf16.msra.mxu0 %v658
    %678 = vmatprep.subr.bf16.mxu0 0
    %679 = vmatpush1.bf16.msra.mxu0 %v659
    %680 = vmatprep.subr.bf16.mxu0 0
    %681 = vmatpush1.bf16.msra.mxu0 %v660
    %682 = vmatprep.subr.bf16.mxu0 0
    %683 = vmatpush1.bf16.msra.mxu0 %v661
    %684 = vmatprep.subr.bf16.mxu0 0
    %685 = vmatpush1.bf16.msra.mxu0 %v662
    %686 = vmatprep.subr.bf16.mxu0 0
    %687 = vmatpush1.bf16.msra.mxu0 %v663
    %688 = vmatprep.subr.bf16.mxu0 0
    %689 = vmatpush1.bf16.msra.mxu0 0
    %690 = vmatprep.subr.bf16.mxu0 0
    %691 = vmatpush1.bf16.msra.mxu0 0
    %692 = vmatprep.subr.bf16.mxu0 0
    %693 = vmatpush1.bf16.msra.mxu0 0
    %694 = vmatprep.subr.bf16.mxu0 0
    %695 = vmatpush1.bf16.msra.mxu0 0
    %696 = vmatprep.subr.bf16.mxu0 0
    %697 = vmatpush1.bf16.msra.mxu0 0
    %698 = vmatprep.subr.bf16.mxu0 0
    %699 = vmatpush1.bf16.msra.mxu0 0
    %700 = vmatprep.subr.bf16.mxu0 0
    %701 = vmatpush1.bf16.msra.mxu0 0
    %702 = vmatprep.subr.bf16.mxu0 0
    %703 = vmatpush1.bf16.msra.mxu0 0
    %704 = vmatprep.mubr.bf16.mxu0 0
    %705 = vmatmul.mubr.bf16.gmra.mrb[0].mxu0 %v600
    %v706 = vpop.f32.mrb[0].mxu0
    %v707 = vadd.f32 %v622, %v706
    %v708 = vpop.f32.mrb[0].mxu0
    %v709 = vpop.f32.mrb[0].mxu0
    %v710 = vpop.f32.mrb[0].mxu0
    %711 = vdwg.mxu0
    %vm712 = vcmask 1041408
    %v713 = vsel %vm712, %v707, -inf
    %714 = vmax.xlane.f32.xlu0 %v713
    %v715 = vpop.xlane.xlu0 %714
    %v716 = vsub.f32 %v707, %v715
    %v717 = vmul.f32 %v716, 1.442695
    %v718 = vpow.pop %v717
    %v719 = vsel %vm712, %v718, 0.0
    %720 = vadd.xlane.f32.xlu0 %v719
    %v721 = vpop.xlane.xlu0 %720
    %v722 = vlog2.pop %v721
    %v723 = vmul.f32 %v722, 0.6931472
    %v724 = vadd.f32 %v715, %v723
    %v725 = vlaneseq
    %v726 = vand.u32 %v725, 127
    %v727 = vld [vmem:[%s2] sm:$0x3]
    %728 = vset.pattern.permute.xlu0 0
    %729 = vperm.xlu0 %728, %v727
    %v730 = vpop.permute.xlu0 %729
    %vm731 = vcmp.eq.s32.totalorder %v726, %v730
    %v732 = vsel %vm731, 1, 0
    %v733 = vcvt.s32.f32 %v732
    %v734 = vmul.f32 %v733, %v707
    %v735 = vsel %vm712, %v734, 0.0
    %736 = vadd.xlane.f32.xlu0 %v735
    %v737 = vpop.xlane.xlu0 %736
    %v738 = vsub.f32 %v724, %v737
    %vm739 = vcmp.eq.s32.totalorder %v726, 4
    %v740 = vsel %vm739, %v738, %v707
    %741 = vst [vmem:[#allocation11] sm:$0x3] %v740
    // Predicated region
    $region70: #{tpu_custom_call.1} parent=1 // pred_check
      _
    $region71: #{tpu_custom_call.1} parent=1 // pred_check_branch
      %743 = sbr.rel (0) target = $region73
    $region72: #{tpu_custom_call.1} parent=1 // pred_region
      %s745 = ssub.s32 32, 32
      %746 = vsyncadd [#allocation4], %s745
      %s748 = sshll.u32 [#allocation11], 4
      %s749 = int_to_ptr.vmem [resolvable:$true] %s748
      %751 = dma.vmem_to_hbm [thread:$0]  %s749, 32, %s12, [#allocation4]
    $region73: #{tpu_custom_call.1} parent=1 // pred_fallthru
      _
    // Predicated region
    $region74: #{tpu_custom_call.1} parent=1 // pred_check
      _
    $region75: #{tpu_custom_call.1} parent=1 // pred_check_branch
      %753 = sbr.rel (0) target = $region77
    $region76: #{tpu_custom_call.1} parent=1 // pred_region
      %754 = dma.done [#allocation4], 32
    $region77: #{tpu_custom_call.1} parent=1 // pred_fallthru
      _
    %755 = vsyncpa [#allocation3], 1
    %756 = vsyncpa [#allocation6], 1
    %757 = vsyncpa [#allocation9], 1
    %758 = vsyncpa [#allocation4], 1

// kernel: tpu_custom_call.1
$region0: #{tpu_custom_call.1}
  #allocation0 [shape = 'u32[]', space=smem, size = 0x4, offset = 0x4, fixed_abs, tag = 'smem constant byte address 0x4 - core index']
  #allocation1 [shape = 'u32[144,128]{1,0:T(1,128)}', space=vmem, size = 0x12000, scoped, tag = 'internal scratch']
  %s0 = inlined_call_operand.vmem [shape: f32[2,128], index: 0, kind: input, shape index: {}]
  %s1 = inlined_call_operand.vmem [shape: f32[2,128], index: 1, kind: input, shape index: {}]
  %s2 = inlined_call_operand.vmem [shape: s32[2,1], index: 2, kind: input, shape index: {}]
  %s3 = inlined_call_operand.hbm [shape: bf16[128,128], index: 3, kind: input, shape index: {}]
  %s4 = inlined_call_operand.vmem [shape: f32[1,128], index: 4, kind: input, shape index: {}]
  %s5 = inlined_call_operand.hbm [shape: bf16[128,128], index: 5, kind: input, shape index: {}]
  %s6 = inlined_call_operand.vmem [shape: f32[1,128], index: 6, kind: input, shape index: {}]
  %s7 = inlined_call_operand.hbm [shape: bf16[128,128], index: 7, kind: input, shape index: {}]
  %s8 = inlined_call_operand.hbm [shape: bf16[128,128], index: 8, kind: input, shape index: {}]
  %s9 = inlined_call_operand.vmem [shape: f32[1,128], index: 9, kind: input, shape index: {}]
  %s10 = inlined_call_operand.hbm [shape: bf16[128,128], index: 10, kind: input, shape index: {}]
  %s11 = inlined_call_operand.vmem [shape: f32[1,128], index: 11, kind: input, shape index: {}]
  %s12 = inlined_call_operand.hbm [shape: f32[2,128], index: 12, kind: output, shape index: {}]
  %s13 = sld [smem:[#allocation0]]
  $region78: #{tpu_custom_call.1} parent=0
    _
  %s15 = ssub.s32 1, %s13
  %s16 = scalar_select 0, %s15, %s13
  $region1: #{tpu_custom_call.1} parent=0
    #allocation2 [shape = 'u8[32768]{0}', space=vmem, size = 0x8000, scoped, tag = 'input window, operand 3, single buffered']
    #allocation3 [shape = 's32[1]{0}', space=sflag, size = 0x4, scoped, tag = 'scoped memory for tpu_custom_call.1']
    #allocation4 [shape = 's32[1]{0}', space=sflag, size = 0x4, scoped, tag = 'scoped memory for tpu_custom_call.1']
    #allocation5 [shape = 'u8[32768]{0}', space=vmem, size = 0x8000, scoped, tag = 'input window, operand 5, single buffered']
    #allocation6 [shape = 's32[1]{0}', space=sflag, size = 0x4, scoped, tag = 'scoped memory for tpu_custom_call.1']
    #allocation7 [shape = 'u8[32768]{0}', space=vmem, size = 0x8000, scoped, tag = 'input window, operand 7, single buffered']
    #allocation8 [shape = 'u8[32768]{0}', space=vmem, size = 0x8000, scoped, tag = 'input window, operand 8, single buffered']
    #allocation9 [shape = 's32[1]{0}', space=sflag, size = 0x4, scoped, tag = 'scoped memory for tpu_custom_call.1']
    #allocation10 [shape = 'u8[32768]{0}', space=vmem, size = 0x8000, scoped, tag = 'input window, operand 10, single buffered']
    #allocation11 [shape = 'u8[1024]{0}', space=vmem, size = 0x400, scoped, tag = 'output window, operand 0, single buffered']
    %17 = vsyncpa [#allocation3], 0
    %18 = vsyncpa [#allocation6], 0
    %19 = vsyncpa [#allocation9], 0
    %20 = vsyncpa [#allocation4], 0
    // Predicated region
    $region2: #{tpu_custom_call.1} parent=1 // pred_check
      _
    $region3: #{tpu_custom_call.1} parent=1 // pred_check_branch
      %22 = sbr.rel (0) target = $region5
    $region4: #{tpu_custom_call.1} parent=1 // pred_region
      _
    $region5: #{tpu_custom_call.1} parent=1 // pred_fallthru
      _
    // Predicated region
    $region6: #{tpu_custom_call.1} parent=1 // pred_check
      _
    $region7: #{tpu_custom_call.1} parent=1 // pred_check_branch
      %24 = sbr.rel (0) target = $region9
    $region8: #{tpu_custom_call.1} parent=1 // pred_region
      _
    $region9: #{tpu_custom_call.1} parent=1 // pred_fallthru
      _
    // Predicated region
    $region10: #{tpu_custom_call.1} parent=1 // pred_check
      _
    $region11: #{tpu_custom_call.1} parent=1 // pred_check_branch
      %26 = sbr.rel (0) target = $region13
    $region12: #{tpu_custom_call.1} parent=1 // pred_region
      _
    $region13: #{tpu_custom_call.1} parent=1 // pred_fallthru
      _
    // Predicated region
    $region14: #{tpu_custom_call.1} parent=1 // pred_check
      _
    $region15: #{tpu_custom_call.1} parent=1 // pred_check_branch
      %28 = sbr.rel (0) target = $region17
    $region16: #{tpu_custom_call.1} parent=1 // pred_region
      %s30 = ssub.s32 1024, 1024
      %31 = vsyncadd [#allocation3], %s30
      %s32 = sshll.u32 [#allocation2], 4
      %s33 = int_to_ptr.vmem [resolvable:$true] %s32
      %38 = dma.hbm_to_vmem [thread:$0]  %s3, 1024, %s33, [#allocation3], 64, 64, 4
    $region17: #{tpu_custom_call.1} parent=1 // pred_fallthru
      _
    // Predicated region
    $region18: #{tpu_custom_call.1} parent=1 // pred_check
      _
    $region19: #{tpu_custom_call.1} parent=1 // pred_check_branch
      %40 = sbr.rel (0) target = $region21
    $region20: #{tpu_custom_call.1} parent=1 // pred_region
      _
    $region21: #{tpu_custom_call.1} parent=1 // pred_fallthru
      _
    // Predicated region
    $region22: #{tpu_custom_call.1} parent=1 // pred_check
      _
    $region23: #{tpu_custom_call.1} parent=1 // pred_check_branch
      %42 = sbr.rel (0) target = $region25
    $region24: #{tpu_custom_call.1} parent=1 // pred_region
      %s44 = ssub.s32 1024, 1024
      %45 = vsyncadd [#allocation6], %s44
      %s46 = sshll.u32 [#allocation5], 4
      %s47 = int_to_ptr.vmem [resolvable:$true] %s46
      %52 = dma.hbm_to_vmem [thread:$0]  %s5, 1024, %s47, [#allocation6], 64, 64, 4
    $region25: #{tpu_custom_call.1} parent=1 // pred_fallthru
      _
    // Predicated region
    $region26: #{tpu_custom_call.1} parent=1 // pred_check
      _
    $region27: #{tpu_custom_call.1} parent=1 // pred_check_branch
      %54 = sbr.rel (0) target = $region29
    $region28: #{tpu_custom_call.1} parent=1 // pred_region
      _
    $region29: #{tpu_custom_call.1} parent=1 // pred_fallthru
      _
    // Predicated region
    $region30: #{tpu_custom_call.1} parent=1 // pred_check
      _
    $region31: #{tpu_custom_call.1} parent=1 // pred_check_branch
      %56 = sbr.rel (0) target = $region33
    $region32: #{tpu_custom_call.1} parent=1 // pred_region
      %s58 = ssub.s32 1024, 1024
      %59 = vsyncadd [#allocation6], %s58
      %s60 = sshll.u32 [#allocation7], 4
      %s61 = int_to_ptr.vmem [resolvable:$true] %s60
      %66 = dma.hbm_to_vmem [thread:$0]  %s7, 1024, %s61, [#allocation6], 64, 64, 4
    $region33: #{tpu_custom_call.1} parent=1 // pred_fallthru
      _
    // Predicated region
    $region34: #{tpu_custom_call.1} parent=1 // pred_check
      _
    $region35: #{tpu_custom_call.1} parent=1 // pred_check_branch
      %68 = sbr.rel (0) target = $region37
    $region36: #{tpu_custom_call.1} parent=1 // pred_region
      %s70 = ssub.s32 1024, 1024
      %71 = vsyncadd [#allocation9], %s70
      %s72 = sshll.u32 [#allocation8], 4
      %s73 = int_to_ptr.vmem [resolvable:$true] %s72
      %78 = dma.hbm_to_vmem [thread:$0]  %s8, 1024, %s73, [#allocation9], 64, 64, 4
    $region37: #{tpu_custom_call.1} parent=1 // pred_fallthru
      _
    // Predicated region
    $region38: #{tpu_custom_call.1} parent=1 // pred_check
      _
    $region39: #{tpu_custom_call.1} parent=1 // pred_check_branch
      %80 = sbr.rel (0) target = $region41
    $region40: #{tpu_custom_call.1} parent=1 // pred_region
      _
    $region41: #{tpu_custom_call.1} parent=1 // pred_fallthru
      _
    // Predicated region
    $region42: #{tpu_custom_call.1} parent=1 // pred_check
      _
    $region43: #{tpu_custom_call.1} parent=1 // pred_check_branch
      %82 = sbr.rel (0) target = $region45
    $region44: #{tpu_custom_call.1} parent=1 // pred_region
      %s84 = ssub.s32 1024, 1024
      %85 = vsyncadd [#allocation9], %s84
      %s86 = sshll.u32 [#allocation10], 4
      %s87 = int_to_ptr.vmem [resolvable:$true] %s86
      %92 = dma.hbm_to_vmem [thread:$0]  %s10, 1024, %s87, [#allocation9], 64, 64, 4
    $region45: #{tpu_custom_call.1} parent=1 // pred_fallthru
      _
    // Predicated region
    $region46: #{tpu_custom_call.1} parent=1 // pred_check
      _
    $region47: #{tpu_custom_call.1} parent=1 // pred_check_branch
      %94 = sbr.rel (0) target = $region49
    $region48: #{tpu_custom_call.1} parent=1 // pred_region
      _
    $region49: #{tpu_custom_call.1} parent=1 // pred_fallthru
      _
    // Predicated region
    $region50: #{tpu_custom_call.1} parent=1 // pred_check
      _
    $region51: #{tpu_custom_call.1} parent=1 // pred_check_branch
      %96 = sbr.rel (0) target = $region53
    $region52: #{tpu_custom_call.1} parent=1 // pred_region
      %97 = dma.done [#allocation3], 1024
    $region53: #{tpu_custom_call.1} parent=1 // pred_fallthru
      _
    // Predicated region
    $region54: #{tpu_custom_call.1} parent=1 // pred_check
      _
    $region55: #{tpu_custom_call.1} parent=1 // pred_check_branch
      %99 = sbr.rel (0) target = $region57
    $region56: #{tpu_custom_call.1} parent=1 // pred_region
      %100 = dma.done [#allocation6], 1024
    $region57: #{tpu_custom_call.1} parent=1 // pred_fallthru
      _
    // Predicated region
    $region58: #{tpu_custom_call.1} parent=1 // pred_check
      _
    $region59: #{tpu_custom_call.1} parent=1 // pred_check_branch
      %102 = sbr.rel (0) target = $region61
    $region60: #{tpu_custom_call.1} parent=1 // pred_region
      %103 = dma.done [#allocation6], 1024
    $region61: #{tpu_custom_call.1} parent=1 // pred_fallthru
      _
    // Predicated region
    $region62: #{tpu_custom_call.1} parent=1 // pred_check
      _
    $region63: #{tpu_custom_call.1} parent=1 // pred_check_branch
      %105 = sbr.rel (0) target = $region65
    $region64: #{tpu_custom_call.1} parent=1 // pred_region
      %106 = dma.done [#allocation9], 1024
    $region65: #{tpu_custom_call.1} parent=1 // pred_fallthru
      _
    // Predicated region
    $region66: #{tpu_custom_call.1} parent=1 // pred_check
      _
    $region67: #{tpu_custom_call.1} parent=1 // pred_check_branch
      %108 = sbr.rel (0) target = $region69
    $region68: #{tpu_custom_call.1} parent=1 // pred_region
      %109 = dma.done [#allocation9], 1024
    $region69: #{tpu_custom_call.1} parent=1 // pred_fallthru
      _
    %v111 = vld [vmem:[%s0] sm:$0x3]
    %v112 = vmul.f32 %v111, 0.5
    %v113 = vmul.f32 %v111, 0.044715
    %v114 = vmul.f32 %v113, %v111
    %v115 = vmul.f32 %v114, %v111
    %v116 = vadd.f32 %v111, %v115
    %v117 = vmul.f32 %v116, 0.7978846
    %v118 = vtanh.pop %v117
    %v119 = vadd.f32 %v118, 1.0
    %v120 = vmul.f32 %v112, %v119
    %v121 = vld [vmem:[%s1] sm:$0x3]
    %v122 = vmul.f32 %v121, 0.5
    %v123 = vmul.f32 %v121, 0.044715
    %v124 = vmul.f32 %v123, %v121
    %v125 = vmul.f32 %v124, %v121
    %v126 = vadd.f32 %v121, %v125
    %v127 = vmul.f32 %v126, 0.7978846
    %v128 = vtanh.pop %v127
    %v129 = vadd.f32 %v128, 1.0
    %v130 = vmul.f32 %v122, %v129
    %v131 = vpack.c.bf16 %v120, %v120
    %v132 = vld [vmem:[#allocation2] sm:$0xf]
    %v133 = vld [vmem:[#allocation2 + $0x4] sm:$0xf]
    %v134 = vld [vmem:[#allocation2 + $0x8] sm:$0xf]
    %v135 = vld [vmem:[#allocation2 + $0xc] sm:$0xf]
    %v136 = vld [vmem:[#allocation2 + $0x10] sm:$0xf]
    %v137 = vld [vmem:[#allocation2 + $0x14] sm:$0xf]
    %v138 = vld [vmem:[#allocation2 + $0x18] sm:$0xf]
    %v139 = vld [vmem:[#allocation2 + $0x1c] sm:$0xf]
    %v140 = vld [vmem:[#allocation2 + $0x20] sm:$0xf]
    %v141 = vld [vmem:[#allocation2 + $0x24] sm:$0xf]
    %v142 = vld [vmem:[#allocation2 + $0x28] sm:$0xf]
    %v143 = vld [vmem:[#allocation2 + $0x2c] sm:$0xf]
    %v144 = vld [vmem:[#allocation2 + $0x30] sm:$0xf]
    %v145 = vld [vmem:[#allocation2 + $0x34] sm:$0xf]
    %v146 = vld [vmem:[#allocation2 + $0x38] sm:$0xf]
    %v147 = vld [vmem:[#allocation2 + $0x3c] sm:$0xf]
    %v148 = vld [vmem:[%s4] sm:$0x1]
    %v150 = vlaneseq
    %v151 = vshrl.u32 %v150, 7
    %v152 = vsub.s32 0, %v151
    %v153 = vrot.slane %v148, %v152
    %v171 = vunpack.c.l.b16 %v132
    %v172 = vunpack.c.l.b16 %v133
    %v173 = vunpack.c.l.b16 %v134
    %v174 = vunpack.c.l.b16 %v135
    %v175 = vunpack.c.l.b16 %v136
    %v176 = vunpack.c.l.b16 %v137
    %v177 = vunpack.c.l.b16 %v138
    %v178 = vunpack.c.l.b16 %v139
    %v179 = vunpack.c.l.b16 %v140
    %v180 = vunpack.c.l.b16 %v141
    %v181 = vunpack.c.l.b16 %v142
    %v182 = vunpack.c.l.b16 %v143
    %v183 = vunpack.c.l.b16 %v144
    %v184 = vunpack.c.l.b16 %v145
    %v185 = vunpack.c.l.b16 %v146
    %v186 = vunpack.c.l.b16 %v147
    %v187 = vpack.c.b16 %v172, %v171
    %v188 = vpack.c.b16 %v174, %v173
    %v189 = vpack.c.b16 %v176, %v175
    %v190 = vpack.c.b16 %v178, %v177
    %v191 = vpack.c.b16 %v180, %v179
    %v192 = vpack.c.b16 %v182, %v181
    %v193 = vpack.c.b16 %v184, %v183
    %v194 = vpack.c.b16 %v186, %v185
    %203 = vmatprep.subr.bf16.mxu0 0
    %204 = vmatpush1.bf16.msra.mxu0 %v187
    %205 = vmatprep.subr.bf16.mxu0 0
    %206 = vmatpush1.bf16.msra.mxu0 %v188
    %207 = vmatprep.subr.bf16.mxu0 0
    %208 = vmatpush1.bf16.msra.mxu0 %v189
    %209 = vmatprep.subr.bf16.mxu0 0
    %210 = vmatpush1.bf16.msra.mxu0 %v190
    %211 = vmatprep.subr.bf16.mxu0 0
    %212 = vmatpush1.bf16.msra.mxu0 %v191
    %213 = vmatprep.subr.bf16.mxu0 0
    %214 = vmatpush1.bf16.msra.mxu0 %v192
    %215 = vmatprep.subr.bf16.mxu0 0
    %216 = vmatpush1.bf16.msra.mxu0 %v193
    %217 = vmatprep.subr.bf16.mxu0 0
    %218 = vmatpush1.bf16.msra.mxu0 %v194
    %219 = vmatprep.subr.bf16.mxu0 0
    %220 = vmatpush1.bf16.msra.mxu0 0
    %221 = vmatprep.subr.bf16.mxu0 0
    %222 = vmatpush1.bf16.msra.mxu0 0
    %223 = vmatprep.subr.bf16.mxu0 0
    %224 = vmatpush1.bf16.msra.mxu0 0
    %225 = vmatprep.subr.bf16.mxu0 0
    %226 = vmatpush1.bf16.msra.mxu0 0
    %227 = vmatprep.subr.bf16.mxu0 0
    %228 = vmatpush1.bf16.msra.mxu0 0
    %229 = vmatprep.subr.bf16.mxu0 0
    %230 = vmatpush1.bf16.msra.mxu0 0
    %231 = vmatprep.subr.bf16.mxu0 0
    %232 = vmatpush1.bf16.msra.mxu0 0
    %233 = vmatprep.subr.bf16.mxu0 0
    %234 = vmatpush1.bf16.msra.mxu0 0
    %235 = vmatprep.mubr.bf16.mxu0 0
    %236 = vmatmul.mubr.bf16.gmra.mrb[0].mxu0 %v131
    %v237 = vpop.f32.mrb[0].mxu0
    %v238 = vadd.f32 %v153, %v237
    %v239 = vpop.f32.mrb[0].mxu0
    %v240 = vpop.f32.mrb[0].mxu0
    %v241 = vpop.f32.mrb[0].mxu0
    %242 = vdwg.mxu0
    %v243 = vmul.f32 %v238, 0.5
    %v244 = vmul.f32 %v238, 0.044715
    %v245 = vmul.f32 %v244, %v238
    %v246 = vmul.f32 %v245, %v238
    %v247 = vadd.f32 %v238, %v246
    %v248 = vmul.f32 %v247, 0.7978846
    %v249 = vtanh.pop %v248
    %v250 = vadd.f32 %v249, 1.0
    %v251 = vmul.f32 %v243, %v250
    %v252 = vpack.c.bf16 %v130, %v130
    %v253 = vld [vmem:[#allocation5] sm:$0xf]
    %v254 = vld [vmem:[#allocation5 + $0x4] sm:$0xf]
    %v255 = vld [vmem:[#allocation5 + $0x8] sm:$0xf]
    %v256 = vld [vmem:[#allocation5 + $0xc] sm:$0xf]
    %v257 = vld [vmem:[#allocation5 + $0x10] sm:$0xf]
    %v258 = vld [vmem:[#allocation5 + $0x14] sm:$0xf]
    %v259 = vld [vmem:[#allocation5 + $0x18] sm:$0xf]
    %v260 = vld [vmem:[#allocation5 + $0x1c] sm:$0xf]
    %v261 = vld [vmem:[#allocation5 + $0x20] sm:$0xf]
    %v262 = vld [vmem:[#allocation5 + $0x24] sm:$0xf]
    %v263 = vld [vmem:[#allocation5 + $0x28] sm:$0xf]
    %v264 = vld [vmem:[#allocation5 + $0x2c] sm:$0xf]
    %v265 = vld [vmem:[#allocation5 + $0x30] sm:$0xf]
    %v266 = vld [vmem:[#allocation5 + $0x34] sm:$0xf]
    %v267 = vld [vmem:[#allocation5 + $0x38] sm:$0xf]
    %v268 = vld [vmem:[#allocation5 + $0x3c] sm:$0xf]
    %v269 = vld [vmem:[%s6] sm:$0x1]
    %v271 = vlaneseq
    %v272 = vshrl.u32 %v271, 7
    %v273 = vsub.s32 0, %v272
    %v274 = vrot.slane %v269, %v273
    %v292 = vunpack.c.l.b16 %v253
    %v293 = vunpack.c.l.b16 %v254
    %v294 = vunpack.c.l.b16 %v255
    %v295 = vunpack.c.l.b16 %v256
    %v296 = vunpack.c.l.b16 %v257
    %v297 = vunpack.c.l.b16 %v258
    %v298 = vunpack.c.l.b16 %v259
    %v299 = vunpack.c.l.b16 %v260
    %v300 = vunpack.c.l.b16 %v261
    %v301 = vunpack.c.l.b16 %v262
    %v302 = vunpack.c.l.b16 %v263
    %v303 = vunpack.c.l.b16 %v264
    %v304 = vunpack.c.l.b16 %v265
    %v305 = vunpack.c.l.b16 %v266
    %v306 = vunpack.c.l.b16 %v267
    %v307 = vunpack.c.l.b16 %v268
    %v308 = vpack.c.b16 %v293, %v292
    %v309 = vpack.c.b16 %v295, %v294
    %v310 = vpack.c.b16 %v297, %v296
    %v311 = vpack.c.b16 %v299, %v298
    %v312 = vpack.c.b16 %v301, %v300
    %v313 = vpack.c.b16 %v303, %v302
    %v314 = vpack.c.b16 %v305, %v304
    %v315 = vpack.c.b16 %v307, %v306
    %324 = vmatprep.subr.bf16.mxu0 0
    %325 = vmatpush1.bf16.msra.mxu0 %v308
    %326 = vmatprep.subr.bf16.mxu0 0
    %327 = vmatpush1.bf16.msra.mxu0 %v309
    %328 = vmatprep.subr.bf16.mxu0 0
    %329 = vmatpush1.bf16.msra.mxu0 %v310
    %330 = vmatprep.subr.bf16.mxu0 0
    %331 = vmatpush1.bf16.msra.mxu0 %v311
    %332 = vmatprep.subr.bf16.mxu0 0
    %333 = vmatpush1.bf16.msra.mxu0 %v312
    %334 = vmatprep.subr.bf16.mxu0 0
    %335 = vmatpush1.bf16.msra.mxu0 %v313
    %336 = vmatprep.subr.bf16.mxu0 0
    %337 = vmatpush1.bf16.msra.mxu0 %v314
    %338 = vmatprep.subr.bf16.mxu0 0
    %339 = vmatpush1.bf16.msra.mxu0 %v315
    %340 = vmatprep.subr.bf16.mxu0 0
    %341 = vmatpush1.bf16.msra.mxu0 0
    %342 = vmatprep.subr.bf16.mxu0 0
    %343 = vmatpush1.bf16.msra.mxu0 0
    %344 = vmatprep.subr.bf16.mxu0 0
    %345 = vmatpush1.bf16.msra.mxu0 0
    %346 = vmatprep.subr.bf16.mxu0 0
    %347 = vmatpush1.bf16.msra.mxu0 0
    %348 = vmatprep.subr.bf16.mxu0 0
    %349 = vmatpush1.bf16.msra.mxu0 0
    %350 = vmatprep.subr.bf16.mxu0 0
    %351 = vmatpush1.bf16.msra.mxu0 0
    %352 = vmatprep.subr.bf16.mxu0 0
    %353 = vmatpush1.bf16.msra.mxu0 0
    %354 = vmatprep.subr.bf16.mxu0 0
    %355 = vmatpush1.bf16.msra.mxu0 0
    %356 = vmatprep.mubr.bf16.mxu0 0
    %357 = vmatmul.mubr.bf16.gmra.mrb[0].mxu0 %v252
    %v358 = vpop.f32.mrb[0].mxu0
    %v359 = vadd.f32 %v274, %v358
    %v360 = vpop.f32.mrb[0].mxu0
    %v361 = vpop.f32.mrb[0].mxu0
    %v362 = vpop.f32.mrb[0].mxu0
    %363 = vdwg.mxu0
    %v364 = vmul.f32 %v359, 0.5
    %v365 = vmul.f32 %v359, 0.044715
    %v366 = vmul.f32 %v365, %v359
    %v367 = vmul.f32 %v366, %v359
    %v368 = vadd.f32 %v359, %v367
    %v369 = vmul.f32 %v368, 0.7978846
    %v370 = vtanh.pop %v369
    %v371 = vadd.f32 %v370, 1.0
    %v372 = vmul.f32 %v364, %v371
    %v373 = vpack.c.bf16 %v251, %v251
    %v374 = vld [vmem:[#allocation7] sm:$0xf]
    %v375 = vld [vmem:[#allocation7 + $0x4] sm:$0xf]
    %v376 = vld [vmem:[#allocation7 + $0x8] sm:$0xf]
    %v377 = vld [vmem:[#allocation7 + $0xc] sm:$0xf]
    %v378 = vld [vmem:[#allocation7 + $0x10] sm:$0xf]
    %v379 = vld [vmem:[#allocation7 + $0x14] sm:$0xf]
    %v380 = vld [vmem:[#allocation7 + $0x18] sm:$0xf]
    %v381 = vld [vmem:[#allocation7 + $0x1c] sm:$0xf]
    %v382 = vld [vmem:[#allocation7 + $0x20] sm:$0xf]
    %v383 = vld [vmem:[#allocation7 + $0x24] sm:$0xf]
    %v384 = vld [vmem:[#allocation7 + $0x28] sm:$0xf]
    %v385 = vld [vmem:[#allocation7 + $0x2c] sm:$0xf]
    %v386 = vld [vmem:[#allocation7 + $0x30] sm:$0xf]
    %v387 = vld [vmem:[#allocation7 + $0x34] sm:$0xf]
    %v388 = vld [vmem:[#allocation7 + $0x38] sm:$0xf]
    %v389 = vld [vmem:[#allocation7 + $0x3c] sm:$0xf]
    %v390 = vpack.c.bf16 %v372, %v372
    %v391 = vld [vmem:[#allocation8] sm:$0xf]
    %v392 = vld [vmem:[#allocation8 + $0x4] sm:$0xf]
    %v393 = vld [vmem:[#allocation8 + $0x8] sm:$0xf]
    %v394 = vld [vmem:[#allocation8 + $0xc] sm:$0xf]
    %v395 = vld [vmem:[#allocation8 + $0x10] sm:$0xf]
    %v396 = vld [vmem:[#allocation8 + $0x14] sm:$0xf]
    %v397 = vld [vmem:[#allocation8 + $0x18] sm:$0xf]
    %v398 = vld [vmem:[#allocation8 + $0x1c] sm:$0xf]
    %v399 = vld [vmem:[#allocation8 + $0x20] sm:$0xf]
    %v400 = vld [vmem:[#allocation8 + $0x24] sm:$0xf]
    %v401 = vld [vmem:[#allocation8 + $0x28] sm:$0xf]
    %v402 = vld [vmem:[#allocation8 + $0x2c] sm:$0xf]
    %v403 = vld [vmem:[#allocation8 + $0x30] sm:$0xf]
    %v404 = vld [vmem:[#allocation8 + $0x34] sm:$0xf]
    %v405 = vld [vmem:[#allocation8 + $0x38] sm:$0xf]
    %v406 = vld [vmem:[#allocation8 + $0x3c] sm:$0xf]
    %v423 = vunpack.c.l.b16 %v391
    %v424 = vunpack.c.l.b16 %v392
    %v425 = vunpack.c.l.b16 %v393
    %v426 = vunpack.c.l.b16 %v394
    %v427 = vunpack.c.l.b16 %v395
    %v428 = vunpack.c.l.b16 %v396
    %v429 = vunpack.c.l.b16 %v397
    %v430 = vunpack.c.l.b16 %v398
    %v431 = vunpack.c.l.b16 %v399
    %v432 = vunpack.c.l.b16 %v400
    %v433 = vunpack.c.l.b16 %v401
    %v434 = vunpack.c.l.b16 %v402
    %v435 = vunpack.c.l.b16 %v403
    %v436 = vunpack.c.l.b16 %v404
    %v437 = vunpack.c.l.b16 %v405
    %v438 = vunpack.c.l.b16 %v406
    %v439 = vpack.c.b16 %v424, %v423
    %v440 = vpack.c.b16 %v426, %v425
    %v441 = vpack.c.b16 %v428, %v427
    %v442 = vpack.c.b16 %v430, %v429
    %v443 = vpack.c.b16 %v432, %v431
    %v444 = vpack.c.b16 %v434, %v433
    %v445 = vpack.c.b16 %v436, %v435
    %v446 = vpack.c.b16 %v438, %v437
    %455 = vmatprep.subr.bf16.mxu0 0
    %456 = vmatpush1.bf16.msra.mxu0 %v439
    %457 = vmatprep.subr.bf16.mxu0 0
    %458 = vmatpush1.bf16.msra.mxu0 %v440
    %459 = vmatprep.subr.bf16.mxu0 0
    %460 = vmatpush1.bf16.msra.mxu0 %v441
    %461 = vmatprep.subr.bf16.mxu0 0
    %462 = vmatpush1.bf16.msra.mxu0 %v442
    %463 = vmatprep.subr.bf16.mxu0 0
    %464 = vmatpush1.bf16.msra.mxu0 %v443
    %465 = vmatprep.subr.bf16.mxu0 0
    %466 = vmatpush1.bf16.msra.mxu0 %v444
    %467 = vmatprep.subr.bf16.mxu0 0
    %468 = vmatpush1.bf16.msra.mxu0 %v445
    %469 = vmatprep.subr.bf16.mxu0 0
    %470 = vmatpush1.bf16.msra.mxu0 %v446
    %471 = vmatprep.subr.bf16.mxu0 0
    %472 = vmatpush1.bf16.msra.mxu0 0
    %473 = vmatprep.subr.bf16.mxu0 0
    %474 = vmatpush1.bf16.msra.mxu0 0
    %475 = vmatprep.subr.bf16.mxu0 0
    %476 = vmatpush1.bf16.msra.mxu0 0
    %477 = vmatprep.subr.bf16.mxu0 0
    %478 = vmatpush1.bf16.msra.mxu0 0
    %479 = vmatprep.subr.bf16.mxu0 0
    %480 = vmatpush1.bf16.msra.mxu0 0
    %481 = vmatprep.subr.bf16.mxu0 0
    %482 = vmatpush1.bf16.msra.mxu0 0
    %483 = vmatprep.subr.bf16.mxu0 0
    %484 = vmatpush1.bf16.msra.mxu0 0
    %485 = vmatprep.subr.bf16.mxu0 0
    %486 = vmatpush1.bf16.msra.mxu0 0
    %487 = vmatprep.mubr.bf16.mxu0 0
    %488 = vmatmul.mubr.bf16.gmra.mrb[0].mxu0 %v390
    %v489 = vpop.f32.mrb[0].mxu0
    %v490 = vadd.f32 0.0, %v489
    %v491 = vpop.f32.mrb[0].mxu0
    %v492 = vpop.f32.mrb[0].mxu0
    %v493 = vpop.f32.mrb[0].mxu0
    %494 = vdwg.mxu0
    %v511 = vunpack.c.l.b16 %v374
    %v512 = vunpack.c.l.b16 %v375
    %v513 = vunpack.c.l.b16 %v376
    %v514 = vunpack.c.l.b16 %v377
    %v515 = vunpack.c.l.b16 %v378
    %v516 = vunpack.c.l.b16 %v379
    %v517 = vunpack.c.l.b16 %v380
    %v518 = vunpack.c.l.b16 %v381
    %v519 = vunpack.c.l.b16 %v382
    %v520 = vunpack.c.l.b16 %v383
    %v521 = vunpack.c.l.b16 %v384
    %v522 = vunpack.c.l.b16 %v385
    %v523 = vunpack.c.l.b16 %v386
    %v524 = vunpack.c.l.b16 %v387
    %v525 = vunpack.c.l.b16 %v388
    %v526 = vunpack.c.l.b16 %v389
    %v527 = vpack.c.b16 %v512, %v511
    %v528 = vpack.c.b16 %v514, %v513
    %v529 = vpack.c.b16 %v516, %v515
    %v530 = vpack.c.b16 %v518, %v517
    %v531 = vpack.c.b16 %v520, %v519
    %v532 = vpack.c.b16 %v522, %v521
    %v533 = vpack.c.b16 %v524, %v523
    %v534 = vpack.c.b16 %v526, %v525
    %543 = vmatprep.subr.bf16.mxu0 0
    %544 = vmatpush1.bf16.msra.mxu0 %v527
    %545 = vmatprep.subr.bf16.mxu0 0
    %546 = vmatpush1.bf16.msra.mxu0 %v528
    %547 = vmatprep.subr.bf16.mxu0 0
    %548 = vmatpush1.bf16.msra.mxu0 %v529
    %549 = vmatprep.subr.bf16.mxu0 0
    %550 = vmatpush1.bf16.msra.mxu0 %v530
    %551 = vmatprep.subr.bf16.mxu0 0
    %552 = vmatpush1.bf16.msra.mxu0 %v531
    %553 = vmatprep.subr.bf16.mxu0 0
    %554 = vmatpush1.bf16.msra.mxu0 %v532
    %555 = vmatprep.subr.bf16.mxu0 0
    %556 = vmatpush1.bf16.msra.mxu0 %v533
    %557 = vmatprep.subr.bf16.mxu0 0
    %558 = vmatpush1.bf16.msra.mxu0 %v534
    %559 = vmatprep.subr.bf16.mxu0 0
    %560 = vmatpush1.bf16.msra.mxu0 0
    %561 = vmatprep.subr.bf16.mxu0 0
    %562 = vmatpush1.bf16.msra.mxu0 0
    %563 = vmatprep.subr.bf16.mxu0 0
    %564 = vmatpush1.bf16.msra.mxu0 0
    %565 = vmatprep.subr.bf16.mxu0 0
    %566 = vmatpush1.bf16.msra.mxu0 0
    %567 = vmatprep.subr.bf16.mxu0 0
    %568 = vmatpush1.bf16.msra.mxu0 0
    %569 = vmatprep.subr.bf16.mxu0 0
    %570 = vmatpush1.bf16.msra.mxu0 0
    %571 = vmatprep.subr.bf16.mxu0 0
    %572 = vmatpush1.bf16.msra.mxu0 0
    %573 = vmatprep.subr.bf16.mxu0 0
    %574 = vmatpush1.bf16.msra.mxu0 0
    %575 = vmatprep.mubr.bf16.mxu0 0
    %576 = vmatmul.mubr.bf16.gmra.mrb[0].mxu0 %v373
    %v577 = vpop.f32.mrb[0].mxu0
    %v578 = vadd.f32 %v490, %v577
    %v579 = vpop.f32.mrb[0].mxu0
    %v580 = vpop.f32.mrb[0].mxu0
    %v581 = vpop.f32.mrb[0].mxu0
    %582 = vdwg.mxu0
    %v583 = vld [vmem:[%s9] sm:$0x1]
    %v585 = vlaneseq
    %v586 = vshrl.u32 %v585, 7
    %v587 = vsub.s32 0, %v586
    %v588 = vrot.slane %v583, %v587
    %v590 = vadd.f32 %v578, %v588
    %v591 = vmul.f32 %v590, 0.5
    %v592 = vmul.f32 %v590, 0.044715
    %v593 = vmul.f32 %v592, %v590
    %v594 = vmul.f32 %v593, %v590
    %v595 = vadd.f32 %v590, %v594
    %v596 = vmul.f32 %v595, 0.7978846
    %v597 = vtanh.pop %v596
    %v598 = vadd.f32 %v597, 1.0
    %v599 = vmul.f32 %v591, %v598
    %v600 = vpack.c.bf16 %v599, %v599
    %v601 = vld [vmem:[#allocation10] sm:$0xf]
    %v602 = vld [vmem:[#allocation10 + $0x4] sm:$0xf]
    %v603 = vld [vmem:[#allocation10 + $0x8] sm:$0xf]
    %v604 = vld [vmem:[#allocation10 + $0xc] sm:$0xf]
    %v605 = vld [vmem:[#allocation10 + $0x10] sm:$0xf]
    %v606 = vld [vmem:[#allocation10 + $0x14] sm:$0xf]
    %v607 = vld [vmem:[#allocation10 + $0x18] sm:$0xf]
    %v608 = vld [vmem:[#allocation10 + $0x1c] sm:$0xf]
    %v609 = vld [vmem:[#allocation10 + $0x20] sm:$0xf]
    %v610 = vld [vmem:[#allocation10 + $0x24] sm:$0xf]
    %v611 = vld [vmem:[#allocation10 + $0x28] sm:$0xf]
    %v612 = vld [vmem:[#allocation10 + $0x2c] sm:$0xf]
    %v613 = vld [vmem:[#allocation10 + $0x30] sm:$0xf]
    %v614 = vld [vmem:[#allocation10 + $0x34] sm:$0xf]
    %v615 = vld [vmem:[#allocation10 + $0x38] sm:$0xf]
    %v616 = vld [vmem:[#allocation10 + $0x3c] sm:$0xf]
    %v617 = vld [vmem:[%s11] sm:$0x1]
    %v619 = vlaneseq
    %v620 = vshrl.u32 %v619, 7
    %v621 = vsub.s32 0, %v620
    %v622 = vrot.slane %v617, %v621
    %v640 = vunpack.c.l.b16 %v601
    %v641 = vunpack.c.l.b16 %v602
    %v642 = vunpack.c.l.b16 %v603
    %v643 = vunpack.c.l.b16 %v604
    %v644 = vunpack.c.l.b16 %v605
    %v645 = vunpack.c.l.b16 %v606
    %v646 = vunpack.c.l.b16 %v607
    %v647 = vunpack.c.l.b16 %v608
    %v648 = vunpack.c.l.b16 %v609
    %v649 = vunpack.c.l.b16 %v610
    %v650 = vunpack.c.l.b16 %v611
    %v651 = vunpack.c.l.b16 %v612
    %v652 = vunpack.c.l.b16 %v613
    %v653 = vunpack.c.l.b16 %v614
    %v654 = vunpack.c.l.b16 %v615
    %v655 = vunpack.c.l.b16 %v616
    %v656 = vpack.c.b16 %v641, %v640
    %v657 = vpack.c.b16 %v643, %v642
    %v658 = vpack.c.b16 %v645, %v644
    %v659 = vpack.c.b16 %v647, %v646
    %v660 = vpack.c.b16 %v649, %v648
    %v661 = vpack.c.b16 %v651, %v650
    %v662 = vpack.c.b16 %v653, %v652
    %v663 = vpack.c.b16 %v655, %v654
    %672 = vmatprep.subr.bf16.mxu0 0
    %673 = vmatpush1.bf16.msra.mxu0 %v656
    %674 = vmatprep.subr.bf16.mxu0 0
    %675 = vmatpush1.bf16.msra.mxu0 %v657
    %676 = vmatprep.subr.bf16.mxu0 0
    %677 = vmatpush1.bf16.msra.mxu0 %v658
    %678 = vmatprep.subr.bf16.mxu0 0
    %679 = vmatpush1.bf16.msra.mxu0 %v659
    %680 = vmatprep.subr.bf16.mxu0 0
    %681 = vmatpush1.bf16.msra.mxu0 %v660
    %682 = vmatprep.subr.bf16.mxu0 0
    %683 = vmatpush1.bf16.msra.mxu0 %v661
    %684 = vmatprep.subr.bf16.mxu0 0
    %685 = vmatpush1.bf16.msra.mxu0 %v662
    %686 = vmatprep.subr.bf16.mxu0 0
    %687 = vmatpush1.bf16.msra.mxu0 %v663
    %688 = vmatprep.subr.bf16.mxu0 0
    %689 = vmatpush1.bf16.msra.mxu0 0
    %690 = vmatprep.subr.bf16.mxu0 0
    %691 = vmatpush1.bf16.msra.mxu0 0
    %692 = vmatprep.subr.bf16.mxu0 0
    %693 = vmatpush1.bf16.msra.mxu0 0
    %694 = vmatprep.subr.bf16.mxu0 0
    %695 = vmatpush1.bf16.msra.mxu0 0
    %696 = vmatprep.subr.bf16.mxu0 0
    %697 = vmatpush1.bf16.msra.mxu0 0
    %698 = vmatprep.subr.bf16.mxu0 0
    %699 = vmatpush1.bf16.msra.mxu0 0
    %700 = vmatprep.subr.bf16.mxu0 0
    %701 = vmatpush1.bf16.msra.mxu0 0
    %702 = vmatprep.subr.bf16.mxu0 0
    %703 = vmatpush1.bf16.msra.mxu0 0
    %704 = vmatprep.mubr.bf16.mxu0 0
    %705 = vmatmul.mubr.bf16.gmra.mrb[0].mxu0 %v600
    %v706 = vpop.f32.mrb[0].mxu0
    %v707 = vadd.f32 %v622, %v706
    %v708 = vpop.f32.mrb[0].mxu0
    %v709 = vpop.f32.mrb[0].mxu0
    %v710 = vpop.f32.mrb[0].mxu0
    %711 = vdwg.mxu0
    %vm712 = vcmask 1041408
    %v713 = vsel %vm712, %v707, -inf
    %714 = vmax.xlane.f32.xlu0 %v713
    %v715 = vpop.xlane.xlu0 %714
    %v716 = vsub.f32 %v707, %v715
    %v717 = vmul.f32 %v716, 1.442695
    %v718 = vpow.pop %v717
    %v719 = vsel %vm712, %v718, 0.0
    %720 = vadd.xlane.f32.xlu0 %v719
    %v721 = vpop.xlane.xlu0 %720
    %v722 = vlog2.pop %v721
    %v723 = vmul.f32 %v722, 0.6931472
    %v724 = vadd.f32 %v715, %v723
    %v725 = vlaneseq
    %v726 = vand.u32 %v725, 127
    %v727 = vld [vmem:[%s2] sm:$0x3]
    %728 = vset.pattern.permute.xlu0 0
    %729 = vperm.xlu0 %728, %v727
    %v730 = vpop.permute.xlu0 %729
    %vm731 = vcmp.eq.s32.totalorder %v726, %v730
    %v732 = vsel %vm731, 1, 0
    %v733 = vcvt.s32.f32 %v732
    %v734 = vmul.f32 %v733, %v707
    %v735 = vsel %vm712, %v734, 0.0
    %736 = vadd.xlane.f32.xlu0 %v735
    %v737 = vpop.xlane.xlu0 %736
    %v738 = vsub.f32 %v724, %v737
    %vm739 = vcmp.eq.s32.totalorder %v726, 4
    %v740 = vsel %vm739, %v738, %v707
    %741 = vst [vmem:[#allocation11] sm:$0x3] %v740
    // Predicated region
    $region70: #{tpu_custom_call.1} parent=1 // pred_check
      _
    $region71: #{tpu_custom_call.1} parent=1 // pred_check_branch
      %743 = sbr.rel (0) target = $region73
    $region72: #{tpu_custom_call.1} parent=1 // pred_region
      %s745 = ssub.s32 32, 32
      %746 = vsyncadd [#allocation4], %s745
      %s748 = sshll.u32 [#allocation11], 4
      %s749 = int_to_ptr.vmem [resolvable:$true] %s748
      %751 = dma.vmem_to_hbm [thread:$0]  %s749, 32, %s12, [#allocation4]
    $region73: #{tpu_custom_call.1} parent=1 // pred_fallthru
      _
    // Predicated region
    $region74: #{tpu_custom_call.1} parent=1 // pred_check
      _
    $region75: #{tpu_custom_call.1} parent=1 // pred_check_branch
      %753 = sbr.rel (0) target = $region77
    $region76: #{tpu_custom_call.1} parent=1 // pred_region
      %754 = dma.done [#allocation4], 32
    $region77: #{tpu_custom_call.1} parent=1 // pred_fallthru
      _
    %755 = vsyncpa [#allocation3], 1
    %756 = vsyncpa [#allocation6], 1
    %757 = vsyncpa [#allocation9], 1
    %758 = vsyncpa [#allocation4], 1

</llo_original>
